<compile_context>
chip_gen: v7x
topology: tpu7x:2x2x1
jax: 0.10.0
libtpu: 0.0.40
codegen_flags: <defaults>
</compile_context>

<pallas_src>
import jax
import jax.numpy as jnp
from jax.experimental import pallas as pl
from jax.experimental.pallas import tpu as pltpu

NEG_BIG = float(-(2 ** 32) + 1)   # torch: padding = ones * (-2**32 + 1)


# ---------------------------------------------------------------------------
# Fused kernel: GCN+residual -> {sim temporal, var temporal} -> concat
# ---------------------------------------------------------------------------
def _compensate_kernel(feat_ref, sim_ref, tw_ref,
                       gcn_w_ref, gcn_b_ref,
                       sim_pos_ref, qw_ref, kw_ref, vw_ref, slw_ref, slb_ref,
                       var_pos_ref, vvw_ref, vlw_ref, vlb_ref,
                       scal_ref, out_ref):
    T, N, F = feat_ref.shape
    f32 = jnp.float32
    re_w = scal_ref[0]          # TemporalLayer residual weight  (args.re_w)
    trend_w = scal_ref[1]       # VarTemporalLayer3 residual wt  (args.trend_w)

    # ----- GraphConvolution + residual (same gcnlayer for every snapshot) ---
    feat_t = [feat_ref[t] for t in range(T)]                       # T x [N, F]
    feat2d = jnp.concatenate(feat_t, axis=0)                       # [T*N, F]
    support2d = jnp.dot(feat2d, gcn_w_ref[...], preferred_element_type=f32)
    gcn_b = gcn_b_ref[...]                                         # [1, F]
    gout = []
    for t in range(T):
        sup_t = support2d[t * N:(t + 1) * N, :]
        g = jnp.dot(sim_ref[t], sup_t, preferred_element_type=f32)
        gout.append(g + gcn_b + feat_t[t])                         # [N, F]

    # ----- temporal inputs for both paths (per-time-step [N, F] slabs) ------
    ti_sim = [gout[t] + sim_pos_ref[pl.ds(t, 1), :] for t in range(T)]
    ti_var = [gout[t] + var_pos_ref[pl.ds(t, 1), :] for t in range(T)]
    ti_sim2d = jnp.concatenate(ti_sim, axis=0)                     # [T*N, F]
    ti_var2d = jnp.concatenate(ti_var, axis=0)

    # one big matmul per projection instead of many tiny batched contractions
    q2d = jnp.dot(ti_sim2d, qw_ref[...], preferred_element_type=f32)
    k2d = jnp.dot(ti_sim2d, kw_ref[...], preferred_element_type=f32)
    v2d = jnp.dot(ti_sim2d, vw_ref[...], preferred_element_type=f32)
    vv2d = jnp.dot(ti_var2d, vvw_ref[...], preferred_element_type=f32)
    q = [q2d[t * N:(t + 1) * N, :] for t in range(T)]
    k = [k2d[t * N:(t + 1) * N, :] for t in range(T)]
    v = [v2d[t * N:(t + 1) * N, :] for t in range(T)]
    vv = [vv2d[t * N:(t + 1) * N, :] for t in range(T)]

    # ----- sim path: causal per-node self-attention over time (n_heads=1) ---
    sim_ctx = []
    for tq in range(T):
        s = [jnp.sum(q[tq] * k[tk], axis=-1, keepdims=True)        # [N, 1]
             for tk in range(tq + 1)]
        m = s[0]
        for tk in range(1, tq + 1):
            m = jnp.maximum(m, s[tk])
        e = [jnp.exp(s[tk] - m) for tk in range(tq + 1)]
        den = e[0]
        for tk in range(1, tq + 1):
            den = den + e[tk]
        ctx = e[0] * v[0]
        for tk in range(1, tq + 1):
            ctx = ctx + e[tk] * v[tk]
        sim_ctx.append(ctx * (1.0 / den))                          # [N, F]

    # ----- var path: softmax(TimeWeight) weighted value sum -----------------
    # tw_ref is the time-major TimeWeight[-T:, :, -T:]; row tq gives, for
    # every node, the attention logits over key time steps (torch permute
    # folded into the indexing).
    var_ctx = []
    for tq in range(T):
        w = jax.nn.softmax(tw_ref[tq], axis=-1)                    # [N, T]
        ctx = w[:, 0:1] * vv[0]
        for tk in range(1, T):
            ctx = ctx + w[:, tk:tk + 1] * vv[tk]
        var_ctx.append(ctx)                                        # [N, F]

    # ----- feedforward (relu(lin(x)) + x) + residual, batched over T*N ------
    sim_ctx2d = jnp.concatenate(sim_ctx, axis=0)                   # [T*N, F]
    var_ctx2d = jnp.concatenate(var_ctx, axis=0)
    h_sim = jnp.dot(sim_ctx2d, slw_ref[...], preferred_element_type=f32) + slb_ref[...]
    h_var = jnp.dot(var_ctx2d, vlw_ref[...], preferred_element_type=f32) + vlb_ref[...]
    sim_out2d = re_w * (jnp.maximum(h_sim, 0.0) + sim_ctx2d) + ti_sim2d
    var_out2d = trend_w * (jnp.maximum(h_var, 0.0) + var_ctx2d) + ti_var2d

    # ----- lane-dense output: [N, T*2F]; column block t = [sim_t | var_t] ---
    cols = []
    for t in range(T):
        cols.append(sim_out2d[t * N:(t + 1) * N, :])
        cols.append(var_out2d[t * N:(t + 1) * N, :])
    out_ref[...] = jnp.concatenate(cols, axis=-1).astype(out_ref.dtype)


# ---------------------------------------------------------------------------
# Wrapper: CompensateLayer.forward (args.without='none', args.comb='concat')
# ---------------------------------------------------------------------------
def compensate_forward(feat_tnf, sim_tnn, time_weight, params):
    """Returns stacked [N, T, 2F].

    The torch module returns list(torch.unbind(out, dim=1)); that is simply
    [out[:, t, :] for t in range(T)] of this stacked result.
    """
    T, N, F = feat_tnf.shape
    tw = time_weight[-T:, :, -T:]                  # [T, N, T] (permute folded into kernel)
    scal = jnp.array([params["re_w"], params["trend_w"]], jnp.float32)

    const2 = lambda i: (0, 0)
    const3 = lambda i: (0, 0, 0)
    out_flat = pl.pallas_call(
        _compensate_kernel,
        out_shape=jax.ShapeDtypeStruct((N, T * 2 * F), feat_tnf.dtype),
        grid=(1,),
        in_specs=[
            pl.BlockSpec((T, N, F), const3),       # feat (time-major)
            pl.BlockSpec((T, N, N), const3),       # sim adjacency per snapshot
            pl.BlockSpec((T, N, T), const3),       # TimeWeight (sliced)
            pl.BlockSpec((F, F), const2),          # gcn weight
            pl.BlockSpec((1, F), const2),          # gcn bias
            pl.BlockSpec((T, F), const2),          # sim position embeddings
            pl.BlockSpec((F, F), const2),          # Q weights
            pl.BlockSpec((F, F), const2),          # K weights
            pl.BlockSpec((F, F), const2),          # V weights
            pl.BlockSpec((F, F), const2),          # sim lin weight [in, out]
            pl.BlockSpec((1, F), const2),          # sim lin bias
            pl.BlockSpec((T, F), const2),          # var position embeddings
            pl.BlockSpec((F, F), const2),          # var V weights
            pl.BlockSpec((F, F), const2),          # var lin weight
            pl.BlockSpec((1, F), const2),          # var lin bias
            pl.BlockSpec(memory_space=pltpu.MemorySpace.SMEM),   # [re_w, trend_w]
        ],
        out_specs=pl.BlockSpec((N, T * 2 * F), const2),
        compiler_params=pltpu.CompilerParams(
            dimension_semantics=("arbitrary",)),   # single step: no megacore split
    )(
        feat_tnf, sim_tnn, tw,
        params["gcn_w"], params["gcn_b"].reshape(1, F),
        params["sim_pos"][:T], params["sim_qw"], params["sim_kw"],
        params["sim_vw"], params["sim_lw"], params["sim_lb"].reshape(1, F),
        params["var_pos"][:T], params["var_vw"],
        params["var_lw"], params["var_lb"].reshape(1, F),
        scal,
    )
    return out_flat.reshape(N, T, 2 * F)


# ---------------------------------------------------------------------------
# Pure-JAX reference (same math) for a correctness smoke test
# ---------------------------------------------------------------------------
def _reference(feat_tnf, sim_tnn, time_weight, params):
    T, N, F = feat_tnf.shape
    new_feat = jnp.stack([
        sim_tnn[t] @ (feat_tnf[t] @ params["gcn_w"]) + params["gcn_b"] + feat_tnf[t]
        for t in range(T)])
    x = jnp.transpose(new_feat, (1, 0, 2))
    ti = x + params["sim_pos"][:T][None]
    q = ti @ params["sim_qw"]; k = ti @ params["sim_kw"]; v = ti @ params["sim_vw"]
    sc = jnp.einsum('nqh,nkh->nqk', q, k)
    mask = jnp.tril(jnp.ones((T, T)))[None]
    sc = jnp.where(mask == 0, NEG_BIG, sc)
    ctx = jax.nn.softmax(sc, axis=-1) @ v
    ff = jnp.maximum(ctx @ params["sim_lw"] + params["sim_lb"], 0.0) + ctx
    sim_out = params["re_w"] * ff + ti
    ti2 = x + params["var_pos"][:T][None]
    v2 = ti2 @ params["var_vw"]
    tw = jnp.transpose(time_weight[-T:, :, -T:], (1, 0, 2))
    ctx2 = jax.nn.softmax(tw, axis=-1) @ v2
    ff2 = jnp.maximum(ctx2 @ params["var_lw"] + params["var_lb"], 0.0) + ctx2
    var_out = params["trend_w"] * ff2 + ti2
    return jnp.concatenate([sim_out, var_out], axis=-1)           # [N, T, 2F]


if __name__ == "__main__":
    # Small shapes: node_num N=16, time_steps T=4, nout F=32
    N, T, F = 16, 4, 32

    key = jax.random.PRNGKey(0)
    ks = jax.random.split(key, 16)

    stdv = 1.0 / (F ** 0.5)
    xav = (6.0 / (F + F)) ** 0.5
    xav_pos = (6.0 / (T + F)) ** 0.5

    params = dict(
        gcn_w=jax.random.uniform(ks[0], (F, F), jnp.float32, -stdv, stdv),
        gcn_b=jax.random.uniform(ks[1], (F,), jnp.float32, -stdv, stdv),
        sim_pos=jax.random.uniform(ks[2], (T, F), jnp.float32, -xav_pos, xav_pos),
        sim_qw=jax.random.uniform(ks[3], (F, F), jnp.float32, -xav, xav),
        sim_kw=jax.random.uniform(ks[4], (F, F), jnp.float32, -xav, xav),
        sim_vw=jax.random.uniform(ks[5], (F, F), jnp.float32, -xav, xav),
        sim_lw=jax.random.uniform(ks[6], (F, F), jnp.float32, -stdv, stdv),  # [in,out]
        sim_lb=jax.random.uniform(ks[7], (F,), jnp.float32, -stdv, stdv),
        var_pos=jax.random.uniform(ks[8], (T, F), jnp.float32, -xav_pos, xav_pos),
        var_vw=jax.random.uniform(ks[9], (F, F), jnp.float32, -xav, xav),
        var_lw=jax.random.uniform(ks[10], (F, F), jnp.float32, -stdv, stdv),
        var_lb=jax.random.uniform(ks[11], (F,), jnp.float32, -stdv, stdv),
        re_w=0.5,      # args.re_w
        trend_w=0.3,   # args.trend_w
    )

    feat = jax.random.normal(ks[12], (T, N, F), jnp.float32)          # feat_list stacked
    sim = jax.random.uniform(ks[13], (T, N, N), jnp.float32)          # sim_list stacked
    time_weight = jax.random.normal(ks[14], (T, N, T), jnp.float32)   # TimeWeight

    out = compensate_forward(feat, sim, time_weight, params)          # [N, T, 2F]
    out = jax.block_until_ready(out)

    ref = _reference(feat, sim, time_weight, params)
    assert out.shape == (N, T, 2 * F)
    assert jnp.allclose(out, ref, atol=1e-4, rtol=1e-4)
    # torch semantics: list(torch.unbind(out, dim=1)) -> T tensors of [N, 2F]
    outs_list = [out[:, t, :] for t in range(T)]
    for o in outs_list:
        assert o.shape == (N, 2 * F)

    print("KERNEL_OK")
</pallas_src>

<mosaic_0001>
module attributes {stable_mosaic.version = 11 : i64} {
  func.func @_compensate_kernel(%arg0: i32, %arg1: memref<4x16x32xf32, #tpu.memory_space<vmem>>, %arg2: memref<4x16x16xf32, #tpu.memory_space<vmem>>, %arg3: memref<4x16x4xf32, #tpu.memory_space<vmem>>, %arg4: memref<32x32xf32, #tpu.memory_space<vmem>>, %arg5: memref<1x32xf32, #tpu.memory_space<vmem>>, %arg6: memref<4x32xf32, #tpu.memory_space<vmem>>, %arg7: memref<32x32xf32, #tpu.memory_space<vmem>>, %arg8: memref<32x32xf32, #tpu.memory_space<vmem>>, %arg9: memref<32x32xf32, #tpu.memory_space<vmem>>, %arg10: memref<32x32xf32, #tpu.memory_space<vmem>>, %arg11: memref<1x32xf32, #tpu.memory_space<vmem>>, %arg12: memref<4x32xf32, #tpu.memory_space<vmem>>, %arg13: memref<32x32xf32, #tpu.memory_space<vmem>>, %arg14: memref<32x32xf32, #tpu.memory_space<vmem>>, %arg15: memref<1x32xf32, #tpu.memory_space<vmem>>, %arg16: memref<2xf32, #tpu.memory_space<smem>>, %arg17: memref<16x256xf32, #tpu.memory_space<vmem>>) attributes {dimension_semantics = [#tpu.dimension_semantics<arbitrary>], iteration_bounds = array<i64: 1>, scalar_prefetch = 0 : i64, scratch_operands = 0 : i64, tpu.core_type = #tpu.core_type<tc>, window_params = [{pipeline_mode = #tpu.pipeline_mode<synchronous>, transform_indices = @transform_0, window_bounds = array<i64: 4, 16, 32>}, {pipeline_mode = #tpu.pipeline_mode<synchronous>, transform_indices = @transform_1, window_bounds = array<i64: 4, 16, 16>}, {pipeline_mode = #tpu.pipeline_mode<synchronous>, transform_indices = @transform_2, window_bounds = array<i64: 4, 16, 4>}, {pipeline_mode = #tpu.pipeline_mode<synchronous>, transform_indices = @transform_3, window_bounds = array<i64: 32, 32>}, {pipeline_mode = #tpu.pipeline_mode<synchronous>, transform_indices = @transform_4, window_bounds = array<i64: 1, 32>}, {pipeline_mode = #tpu.pipeline_mode<synchronous>, transform_indices = @transform_5, window_bounds = array<i64: 4, 32>}, {pipeline_mode = #tpu.pipeline_mode<synchronous>, transform_indices = @transform_6, window_bounds = array<i64: 32, 32>}, {pipeline_mode = #tpu.pipeline_mode<synchronous>, transform_indices = @transform_7, window_bounds = array<i64: 32, 32>}, {pipeline_mode = #tpu.pipeline_mode<synchronous>, transform_indices = @transform_8, window_bounds = array<i64: 32, 32>}, {pipeline_mode = #tpu.pipeline_mode<synchronous>, transform_indices = @transform_9, window_bounds = array<i64: 32, 32>}, {pipeline_mode = #tpu.pipeline_mode<synchronous>, transform_indices = @transform_10, window_bounds = array<i64: 1, 32>}, {pipeline_mode = #tpu.pipeline_mode<synchronous>, transform_indices = @transform_11, window_bounds = array<i64: 4, 32>}, {pipeline_mode = #tpu.pipeline_mode<synchronous>, transform_indices = @transform_12, window_bounds = array<i64: 32, 32>}, {pipeline_mode = #tpu.pipeline_mode<synchronous>, transform_indices = @transform_13, window_bounds = array<i64: 32, 32>}, {pipeline_mode = #tpu.pipeline_mode<synchronous>, transform_indices = @transform_14, window_bounds = array<i64: 1, 32>}, {transform_indices = @transform_15, window_bounds = array<i64: 2>}, {pipeline_mode = #tpu.pipeline_mode<synchronous>, transform_indices = @transform_16, window_bounds = array<i64: 16, 256>}]} {
    %c0 = arith.constant 0 : index
    %0 = memref.load %arg16[%c0] : memref<2xf32, #tpu.memory_space<smem>>
    %c1 = arith.constant 1 : index
    %1 = memref.load %arg16[%c1] : memref<2xf32, #tpu.memory_space<smem>>
    %c0_0 = arith.constant 0 : index
    %c0_1 = arith.constant 0 : index
    %c0_2 = arith.constant 0 : index
    %2 = vector.load %arg1[%c0_0, %c0_1, %c0_2] : memref<4x16x32xf32, #tpu.memory_space<vmem>>, vector<1x16x32xf32>
    %3 = vector.shape_cast %2 : vector<1x16x32xf32> to vector<16x32xf32>
    %c1_3 = arith.constant 1 : index
    %c0_4 = arith.constant 0 : index
    %c0_5 = arith.constant 0 : index
    %4 = vector.load %arg1[%c1_3, %c0_4, %c0_5] : memref<4x16x32xf32, #tpu.memory_space<vmem>>, vector<1x16x32xf32>
    %5 = vector.shape_cast %4 : vector<1x16x32xf32> to vector<16x32xf32>
    %c2 = arith.constant 2 : index
    %c0_6 = arith.constant 0 : index
    %c0_7 = arith.constant 0 : index
    %6 = vector.load %arg1[%c2, %c0_6, %c0_7] : memref<4x16x32xf32, #tpu.memory_space<vmem>>, vector<1x16x32xf32>
    %7 = vector.shape_cast %6 : vector<1x16x32xf32> to vector<16x32xf32>
    %c3 = arith.constant 3 : index
    %c0_8 = arith.constant 0 : index
    %c0_9 = arith.constant 0 : index
    %8 = vector.load %arg1[%c3, %c0_8, %c0_9] : memref<4x16x32xf32, #tpu.memory_space<vmem>>, vector<1x16x32xf32>
    %9 = vector.shape_cast %8 : vector<1x16x32xf32> to vector<16x32xf32>
    %10 = tpu.concatenate %3, %5, %7, %9 in 0 : vector<16x32xf32>, vector<16x32xf32>, vector<16x32xf32>, vector<16x32xf32> -> vector<64x32xf32>
    %c0_10 = arith.constant 0 : index
    %c0_11 = arith.constant 0 : index
    %11 = vector.load %arg4[%c0_10, %c0_11] : memref<32x32xf32, #tpu.memory_space<vmem>>, vector<32x32xf32>
    %cst = arith.constant dense<0.000000e+00> : vector<64x32xf32>
    %12 = tpu.matmul %10, %11, %cst {dimension_numbers = #tpu.dot_dimension_numbers<[1], [0], [0], [1], [0, 0, 1, 1], [], []>} : vector<64x32xf32>, vector<32x32xf32>, vector<64x32xf32> -> vector<64x32xf32>
    %c0_12 = arith.constant 0 : index
    %c0_13 = arith.constant 0 : index
    %13 = vector.load %arg5[%c0_12, %c0_13] : memref<1x32xf32, #tpu.memory_space<vmem>>, vector<1x32xf32>
    %14 = vector.extract_strided_slice %12 {offsets = [0, 0], sizes = [16, 32], strides = [1, 1]} : vector<64x32xf32> to vector<16x32xf32>
    %c0_14 = arith.constant 0 : index
    %c0_15 = arith.constant 0 : index
    %c0_16 = arith.constant 0 : index
    %15 = vector.load %arg2[%c0_14, %c0_15, %c0_16] : memref<4x16x16xf32, #tpu.memory_space<vmem>>, vector<1x16x16xf32>
    %16 = vector.shape_cast %15 : vector<1x16x16xf32> to vector<16x16xf32>
    %cst_17 = arith.constant dense<0.000000e+00> : vector<16x32xf32>
    %17 = tpu.matmul %16, %14, %cst_17 {dimension_numbers = #tpu.dot_dimension_numbers<[1], [0], [0], [1], [0, 0, 1, 1], [], []>} : vector<16x16xf32>, vector<16x32xf32>, vector<16x32xf32> -> vector<16x32xf32>
    %18 = vector.broadcast %13 : vector<1x32xf32> to vector<16x32xf32>
    %19 = arith.addf %17, %18 : vector<16x32xf32>
    %20 = arith.addf %19, %3 : vector<16x32xf32>
    %21 = vector.extract_strided_slice %12 {offsets = [16, 0], sizes = [16, 32], strides = [1, 1]} : vector<64x32xf32> to vector<16x32xf32>
    %c1_18 = arith.constant 1 : index
    %c0_19 = arith.constant 0 : index
    %c0_20 = arith.constant 0 : index
    %22 = vector.load %arg2[%c1_18, %c0_19, %c0_20] : memref<4x16x16xf32, #tpu.memory_space<vmem>>, vector<1x16x16xf32>
    %23 = vector.shape_cast %22 : vector<1x16x16xf32> to vector<16x16xf32>
    %cst_21 = arith.constant dense<0.000000e+00> : vector<16x32xf32>
    %24 = tpu.matmul %23, %21, %cst_21 {dimension_numbers = #tpu.dot_dimension_numbers<[1], [0], [0], [1], [0, 0, 1, 1], [], []>} : vector<16x16xf32>, vector<16x32xf32>, vector<16x32xf32> -> vector<16x32xf32>
    %25 = vector.broadcast %13 : vector<1x32xf32> to vector<16x32xf32>
    %26 = arith.addf %24, %25 : vector<16x32xf32>
    %27 = arith.addf %26, %5 : vector<16x32xf32>
    %28 = vector.extract_strided_slice %12 {offsets = [32, 0], sizes = [16, 32], strides = [1, 1]} : vector<64x32xf32> to vector<16x32xf32>
    %c2_22 = arith.constant 2 : index
    %c0_23 = arith.constant 0 : index
    %c0_24 = arith.constant 0 : index
    %29 = vector.load %arg2[%c2_22, %c0_23, %c0_24] : memref<4x16x16xf32, #tpu.memory_space<vmem>>, vector<1x16x16xf32>
    %30 = vector.shape_cast %29 : vector<1x16x16xf32> to vector<16x16xf32>
    %cst_25 = arith.constant dense<0.000000e+00> : vector<16x32xf32>
    %31 = tpu.matmul %30, %28, %cst_25 {dimension_numbers = #tpu.dot_dimension_numbers<[1], [0], [0], [1], [0, 0, 1, 1], [], []>} : vector<16x16xf32>, vector<16x32xf32>, vector<16x32xf32> -> vector<16x32xf32>
    %32 = vector.broadcast %13 : vector<1x32xf32> to vector<16x32xf32>
    %33 = arith.addf %31, %32 : vector<16x32xf32>
    %34 = arith.addf %33, %7 : vector<16x32xf32>
    %35 = vector.extract_strided_slice %12 {offsets = [48, 0], sizes = [16, 32], strides = [1, 1]} : vector<64x32xf32> to vector<16x32xf32>
    %c3_26 = arith.constant 3 : index
    %c0_27 = arith.constant 0 : index
    %c0_28 = arith.constant 0 : index
    %36 = vector.load %arg2[%c3_26, %c0_27, %c0_28] : memref<4x16x16xf32, #tpu.memory_space<vmem>>, vector<1x16x16xf32>
    %37 = vector.shape_cast %36 : vector<1x16x16xf32> to vector<16x16xf32>
    %cst_29 = arith.constant dense<0.000000e+00> : vector<16x32xf32>
    %38 = tpu.matmul %37, %35, %cst_29 {dimension_numbers = #tpu.dot_dimension_numbers<[1], [0], [0], [1], [0, 0, 1, 1], [], []>} : vector<16x16xf32>, vector<16x32xf32>, vector<16x32xf32> -> vector<16x32xf32>
    %39 = vector.broadcast %13 : vector<1x32xf32> to vector<16x32xf32>
    %40 = arith.addf %38, %39 : vector<16x32xf32>
    %41 = arith.addf %40, %9 : vector<16x32xf32>
    %c0_30 = arith.constant 0 : index
    %c0_31 = arith.constant 0 : index
    %42 = vector.load %arg6[%c0_30, %c0_31] : memref<4x32xf32, #tpu.memory_space<vmem>>, vector<1x32xf32>
    %43 = vector.broadcast %42 : vector<1x32xf32> to vector<16x32xf32>
    %44 = arith.addf %20, %43 : vector<16x32xf32>
    %c1_32 = arith.constant 1 : index
    %c0_33 = arith.constant 0 : index
    %45 = vector.load %arg6[%c1_32, %c0_33] : memref<4x32xf32, #tpu.memory_space<vmem>>, vector<1x32xf32>
    %46 = vector.broadcast %45 : vector<1x32xf32> to vector<16x32xf32>
    %47 = arith.addf %27, %46 : vector<16x32xf32>
    %c2_34 = arith.constant 2 : index
    %c0_35 = arith.constant 0 : index
    %48 = vector.load %arg6[%c2_34, %c0_35] : memref<4x32xf32, #tpu.memory_space<vmem>>, vector<1x32xf32>
    %49 = vector.broadcast %48 : vector<1x32xf32> to vector<16x32xf32>
    %50 = arith.addf %34, %49 : vector<16x32xf32>
    %c3_36 = arith.constant 3 : index
    %c0_37 = arith.constant 0 : index
    %51 = vector.load %arg6[%c3_36, %c0_37] : memref<4x32xf32, #tpu.memory_space<vmem>>, vector<1x32xf32>
    %52 = vector.broadcast %51 : vector<1x32xf32> to vector<16x32xf32>
    %53 = arith.addf %41, %52 : vector<16x32xf32>
    %c0_38 = arith.constant 0 : index
    %c0_39 = arith.constant 0 : index
    %54 = vector.load %arg12[%c0_38, %c0_39] : memref<4x32xf32, #tpu.memory_space<vmem>>, vector<1x32xf32>
    %55 = vector.broadcast %54 : vector<1x32xf32> to vector<16x32xf32>
    %56 = arith.addf %20, %55 : vector<16x32xf32>
    %c1_40 = arith.constant 1 : index
    %c0_41 = arith.constant 0 : index
    %57 = vector.load %arg12[%c1_40, %c0_41] : memref<4x32xf32, #tpu.memory_space<vmem>>, vector<1x32xf32>
    %58 = vector.broadcast %57 : vector<1x32xf32> to vector<16x32xf32>
    %59 = arith.addf %27, %58 : vector<16x32xf32>
    %c2_42 = arith.constant 2 : index
    %c0_43 = arith.constant 0 : index
    %60 = vector.load %arg12[%c2_42, %c0_43] : memref<4x32xf32, #tpu.memory_space<vmem>>, vector<1x32xf32>
    %61 = vector.broadcast %60 : vector<1x32xf32> to vector<16x32xf32>
    %62 = arith.addf %34, %61 : vector<16x32xf32>
    %c3_44 = arith.constant 3 : index
    %c0_45 = arith.constant 0 : index
    %63 = vector.load %arg12[%c3_44, %c0_45] : memref<4x32xf32, #tpu.memory_space<vmem>>, vector<1x32xf32>
    %64 = vector.broadcast %63 : vector<1x32xf32> to vector<16x32xf32>
    %65 = arith.addf %41, %64 : vector<16x32xf32>
    %66 = tpu.concatenate %44, %47, %50, %53 in 0 : vector<16x32xf32>, vector<16x32xf32>, vector<16x32xf32>, vector<16x32xf32> -> vector<64x32xf32>
    %67 = tpu.concatenate %56, %59, %62, %65 in 0 : vector<16x32xf32>, vector<16x32xf32>, vector<16x32xf32>, vector<16x32xf32> -> vector<64x32xf32>
    %c0_46 = arith.constant 0 : index
    %c0_47 = arith.constant 0 : index
    %68 = vector.load %arg7[%c0_46, %c0_47] : memref<32x32xf32, #tpu.memory_space<vmem>>, vector<32x32xf32>
    %cst_48 = arith.constant dense<0.000000e+00> : vector<64x32xf32>
    %69 = tpu.matmul %66, %68, %cst_48 {dimension_numbers = #tpu.dot_dimension_numbers<[1], [0], [0], [1], [0, 0, 1, 1], [], []>} : vector<64x32xf32>, vector<32x32xf32>, vector<64x32xf32> -> vector<64x32xf32>
    %c0_49 = arith.constant 0 : index
    %c0_50 = arith.constant 0 : index
    %70 = vector.load %arg8[%c0_49, %c0_50] : memref<32x32xf32, #tpu.memory_space<vmem>>, vector<32x32xf32>
    %cst_51 = arith.constant dense<0.000000e+00> : vector<64x32xf32>
    %71 = tpu.matmul %66, %70, %cst_51 {dimension_numbers = #tpu.dot_dimension_numbers<[1], [0], [0], [1], [0, 0, 1, 1], [], []>} : vector<64x32xf32>, vector<32x32xf32>, vector<64x32xf32> -> vector<64x32xf32>
    %c0_52 = arith.constant 0 : index
    %c0_53 = arith.constant 0 : index
    %72 = vector.load %arg9[%c0_52, %c0_53] : memref<32x32xf32, #tpu.memory_space<vmem>>, vector<32x32xf32>
    %cst_54 = arith.constant dense<0.000000e+00> : vector<64x32xf32>
    %73 = tpu.matmul %66, %72, %cst_54 {dimension_numbers = #tpu.dot_dimension_numbers<[1], [0], [0], [1], [0, 0, 1, 1], [], []>} : vector<64x32xf32>, vector<32x32xf32>, vector<64x32xf32> -> vector<64x32xf32>
    %c0_55 = arith.constant 0 : index
    %c0_56 = arith.constant 0 : index
    %74 = vector.load %arg13[%c0_55, %c0_56] : memref<32x32xf32, #tpu.memory_space<vmem>>, vector<32x32xf32>
    %cst_57 = arith.constant dense<0.000000e+00> : vector<64x32xf32>
    %75 = tpu.matmul %67, %74, %cst_57 {dimension_numbers = #tpu.dot_dimension_numbers<[1], [0], [0], [1], [0, 0, 1, 1], [], []>} : vector<64x32xf32>, vector<32x32xf32>, vector<64x32xf32> -> vector<64x32xf32>
    %76 = vector.extract_strided_slice %69 {offsets = [0, 0], sizes = [16, 32], strides = [1, 1]} : vector<64x32xf32> to vector<16x32xf32>
    %77 = vector.extract_strided_slice %69 {offsets = [16, 0], sizes = [16, 32], strides = [1, 1]} : vector<64x32xf32> to vector<16x32xf32>
    %78 = vector.extract_strided_slice %69 {offsets = [32, 0], sizes = [16, 32], strides = [1, 1]} : vector<64x32xf32> to vector<16x32xf32>
    %79 = vector.extract_strided_slice %69 {offsets = [48, 0], sizes = [16, 32], strides = [1, 1]} : vector<64x32xf32> to vector<16x32xf32>
    %80 = vector.extract_strided_slice %71 {offsets = [0, 0], sizes = [16, 32], strides = [1, 1]} : vector<64x32xf32> to vector<16x32xf32>
    %81 = vector.extract_strided_slice %71 {offsets = [16, 0], sizes = [16, 32], strides = [1, 1]} : vector<64x32xf32> to vector<16x32xf32>
    %82 = vector.extract_strided_slice %71 {offsets = [32, 0], sizes = [16, 32], strides = [1, 1]} : vector<64x32xf32> to vector<16x32xf32>
    %83 = vector.extract_strided_slice %71 {offsets = [48, 0], sizes = [16, 32], strides = [1, 1]} : vector<64x32xf32> to vector<16x32xf32>
    %84 = vector.extract_strided_slice %73 {offsets = [0, 0], sizes = [16, 32], strides = [1, 1]} : vector<64x32xf32> to vector<16x32xf32>
    %85 = vector.extract_strided_slice %73 {offsets = [16, 0], sizes = [16, 32], strides = [1, 1]} : vector<64x32xf32> to vector<16x32xf32>
    %86 = vector.extract_strided_slice %73 {offsets = [32, 0], sizes = [16, 32], strides = [1, 1]} : vector<64x32xf32> to vector<16x32xf32>
    %87 = vector.extract_strided_slice %73 {offsets = [48, 0], sizes = [16, 32], strides = [1, 1]} : vector<64x32xf32> to vector<16x32xf32>
    %88 = vector.extract_strided_slice %75 {offsets = [0, 0], sizes = [16, 32], strides = [1, 1]} : vector<64x32xf32> to vector<16x32xf32>
    %89 = vector.extract_strided_slice %75 {offsets = [16, 0], sizes = [16, 32], strides = [1, 1]} : vector<64x32xf32> to vector<16x32xf32>
    %90 = vector.extract_strided_slice %75 {offsets = [32, 0], sizes = [16, 32], strides = [1, 1]} : vector<64x32xf32> to vector<16x32xf32>
    %91 = vector.extract_strided_slice %75 {offsets = [48, 0], sizes = [16, 32], strides = [1, 1]} : vector<64x32xf32> to vector<16x32xf32>
    %92 = arith.mulf %76, %80 : vector<16x32xf32>
    %cst_58 = arith.constant dense<0.000000e+00> : vector<16xf32>
    %93 = vector.multi_reduction <add>, %92, %cst_58 [1] : vector<16x32xf32> to vector<16xf32>
    %94 = vector.shape_cast %93 : vector<16xf32> to vector<16x1xf32>
    %95 = arith.subf %94, %94 : vector<16x1xf32>
    %96 = math.exp %95 : vector<16x1xf32>
    %97 = vector.broadcast %96 : vector<16x1xf32> to vector<16x32xf32>
    %98 = arith.mulf %97, %84 : vector<16x32xf32>
    %cst_59 = arith.constant 1.000000e+00 : f32
    %99 = vector.broadcast %cst_59 : f32 to vector<16x1xf32>
    %100 = arith.divf %99, %96 : vector<16x1xf32>
    %101 = vector.broadcast %100 : vector<16x1xf32> to vector<16x32xf32>
    %102 = arith.mulf %98, %101 : vector<16x32xf32>
    %103 = arith.mulf %77, %80 : vector<16x32xf32>
    %cst_60 = arith.constant dense<0.000000e+00> : vector<16xf32>
    %104 = vector.multi_reduction <add>, %103, %cst_60 [1] : vector<16x32xf32> to vector<16xf32>
    %105 = vector.shape_cast %104 : vector<16xf32> to vector<16x1xf32>
    %106 = arith.mulf %77, %81 : vector<16x32xf32>
    %cst_61 = arith.constant dense<0.000000e+00> : vector<16xf32>
    %107 = vector.multi_reduction <add>, %106, %cst_61 [1] : vector<16x32xf32> to vector<16xf32>
    %108 = vector.shape_cast %107 : vector<16xf32> to vector<16x1xf32>
    %109 = arith.maximumf %105, %108 : vector<16x1xf32>
    %110 = arith.subf %105, %109 : vector<16x1xf32>
    %111 = math.exp %110 : vector<16x1xf32>
    %112 = arith.subf %108, %109 : vector<16x1xf32>
    %113 = math.exp %112 : vector<16x1xf32>
    %114 = arith.addf %111, %113 : vector<16x1xf32>
    %115 = vector.broadcast %111 : vector<16x1xf32> to vector<16x32xf32>
    %116 = arith.mulf %115, %84 : vector<16x32xf32>
    %117 = vector.broadcast %113 : vector<16x1xf32> to vector<16x32xf32>
    %118 = arith.mulf %117, %85 : vector<16x32xf32>
    %119 = arith.addf %116, %118 : vector<16x32xf32>
    %cst_62 = arith.constant 1.000000e+00 : f32
    %120 = vector.broadcast %cst_62 : f32 to vector<16x1xf32>
    %121 = arith.divf %120, %114 : vector<16x1xf32>
    %122 = vector.broadcast %121 : vector<16x1xf32> to vector<16x32xf32>
    %123 = arith.mulf %119, %122 : vector<16x32xf32>
    %124 = arith.mulf %78, %80 : vector<16x32xf32>
    %cst_63 = arith.constant dense<0.000000e+00> : vector<16xf32>
    %125 = vector.multi_reduction <add>, %124, %cst_63 [1] : vector<16x32xf32> to vector<16xf32>
    %126 = vector.shape_cast %125 : vector<16xf32> to vector<16x1xf32>
    %127 = arith.mulf %78, %81 : vector<16x32xf32>
    %cst_64 = arith.constant dense<0.000000e+00> : vector<16xf32>
    %128 = vector.multi_reduction <add>, %127, %cst_64 [1] : vector<16x32xf32> to vector<16xf32>
    %129 = vector.shape_cast %128 : vector<16xf32> to vector<16x1xf32>
    %130 = arith.mulf %78, %82 : vector<16x32xf32>
    %cst_65 = arith.constant dense<0.000000e+00> : vector<16xf32>
    %131 = vector.multi_reduction <add>, %130, %cst_65 [1] : vector<16x32xf32> to vector<16xf32>
    %132 = vector.shape_cast %131 : vector<16xf32> to vector<16x1xf32>
    %133 = arith.maximumf %126, %129 : vector<16x1xf32>
    %134 = arith.maximumf %133, %132 : vector<16x1xf32>
    %135 = arith.subf %126, %134 : vector<16x1xf32>
    %136 = math.exp %135 : vector<16x1xf32>
    %137 = arith.subf %129, %134 : vector<16x1xf32>
    %138 = math.exp %137 : vector<16x1xf32>
    %139 = arith.subf %132, %134 : vector<16x1xf32>
    %140 = math.exp %139 : vector<16x1xf32>
    %141 = arith.addf %136, %138 : vector<16x1xf32>
    %142 = arith.addf %141, %140 : vector<16x1xf32>
    %143 = vector.broadcast %136 : vector<16x1xf32> to vector<16x32xf32>
    %144 = arith.mulf %143, %84 : vector<16x32xf32>
    %145 = vector.broadcast %138 : vector<16x1xf32> to vector<16x32xf32>
    %146 = arith.mulf %145, %85 : vector<16x32xf32>
    %147 = arith.addf %144, %146 : vector<16x32xf32>
    %148 = vector.broadcast %140 : vector<16x1xf32> to vector<16x32xf32>
    %149 = arith.mulf %148, %86 : vector<16x32xf32>
    %150 = arith.addf %147, %149 : vector<16x32xf32>
    %cst_66 = arith.constant 1.000000e+00 : f32
    %151 = vector.broadcast %cst_66 : f32 to vector<16x1xf32>
    %152 = arith.divf %151, %142 : vector<16x1xf32>
    %153 = vector.broadcast %152 : vector<16x1xf32> to vector<16x32xf32>
    %154 = arith.mulf %150, %153 : vector<16x32xf32>
    %155 = arith.mulf %79, %80 : vector<16x32xf32>
    %cst_67 = arith.constant dense<0.000000e+00> : vector<16xf32>
    %156 = vector.multi_reduction <add>, %155, %cst_67 [1] : vector<16x32xf32> to vector<16xf32>
    %157 = vector.shape_cast %156 : vector<16xf32> to vector<16x1xf32>
    %158 = arith.mulf %79, %81 : vector<16x32xf32>
    %cst_68 = arith.constant dense<0.000000e+00> : vector<16xf32>
    %159 = vector.multi_reduction <add>, %158, %cst_68 [1] : vector<16x32xf32> to vector<16xf32>
    %160 = vector.shape_cast %159 : vector<16xf32> to vector<16x1xf32>
    %161 = arith.mulf %79, %82 : vector<16x32xf32>
    %cst_69 = arith.constant dense<0.000000e+00> : vector<16xf32>
    %162 = vector.multi_reduction <add>, %161, %cst_69 [1] : vector<16x32xf32> to vector<16xf32>
    %163 = vector.shape_cast %162 : vector<16xf32> to vector<16x1xf32>
    %164 = arith.mulf %79, %83 : vector<16x32xf32>
    %cst_70 = arith.constant dense<0.000000e+00> : vector<16xf32>
    %165 = vector.multi_reduction <add>, %164, %cst_70 [1] : vector<16x32xf32> to vector<16xf32>
    %166 = vector.shape_cast %165 : vector<16xf32> to vector<16x1xf32>
    %167 = arith.maximumf %157, %160 : vector<16x1xf32>
    %168 = arith.maximumf %167, %163 : vector<16x1xf32>
    %169 = arith.maximumf %168, %166 : vector<16x1xf32>
    %170 = arith.subf %157, %169 : vector<16x1xf32>
    %171 = math.exp %170 : vector<16x1xf32>
    %172 = arith.subf %160, %169 : vector<16x1xf32>
    %173 = math.exp %172 : vector<16x1xf32>
    %174 = arith.subf %163, %169 : vector<16x1xf32>
    %175 = math.exp %174 : vector<16x1xf32>
    %176 = arith.subf %166, %169 : vector<16x1xf32>
    %177 = math.exp %176 : vector<16x1xf32>
    %178 = arith.addf %171, %173 : vector<16x1xf32>
    %179 = arith.addf %178, %175 : vector<16x1xf32>
    %180 = arith.addf %179, %177 : vector<16x1xf32>
    %181 = vector.broadcast %171 : vector<16x1xf32> to vector<16x32xf32>
    %182 = arith.mulf %181, %84 : vector<16x32xf32>
    %183 = vector.broadcast %173 : vector<16x1xf32> to vector<16x32xf32>
    %184 = arith.mulf %183, %85 : vector<16x32xf32>
    %185 = arith.addf %182, %184 : vector<16x32xf32>
    %186 = vector.broadcast %175 : vector<16x1xf32> to vector<16x32xf32>
    %187 = arith.mulf %186, %86 : vector<16x32xf32>
    %188 = arith.addf %185, %187 : vector<16x32xf32>
    %189 = vector.broadcast %177 : vector<16x1xf32> to vector<16x32xf32>
    %190 = arith.mulf %189, %87 : vector<16x32xf32>
    %191 = arith.addf %188, %190 : vector<16x32xf32>
    %cst_71 = arith.constant 1.000000e+00 : f32
    %192 = vector.broadcast %cst_71 : f32 to vector<16x1xf32>
    %193 = arith.divf %192, %180 : vector<16x1xf32>
    %194 = vector.broadcast %193 : vector<16x1xf32> to vector<16x32xf32>
    %195 = arith.mulf %191, %194 : vector<16x32xf32>
    %c0_72 = arith.constant 0 : index
    %c0_73 = arith.constant 0 : index
    %c0_74 = arith.constant 0 : index
    %196 = vector.load %arg3[%c0_72, %c0_73, %c0_74] : memref<4x16x4xf32, #tpu.memory_space<vmem>>, vector<1x16x4xf32>
    %197 = vector.shape_cast %196 : vector<1x16x4xf32> to vector<16x4xf32>
    %cst_75 = arith.constant dense<0xFF800000> : vector<16xf32>
    %198 = vector.multi_reduction <maximumf>, %197, %cst_75 [1] : vector<16x4xf32> to vector<16xf32>
    %cst_76 = arith.constant 0xFF800000 : f32
    %199 = vector.broadcast %cst_76 : f32 to vector<16xf32>
    %200 = arith.maximumf %199, %198 : vector<16xf32>
    %201 = vector.shape_cast %200 : vector<16xf32> to vector<16x1xf32>
    %202 = vector.broadcast %201 : vector<16x1xf32> to vector<16x4xf32>
    %203 = arith.subf %197, %202 : vector<16x4xf32>
    %204 = math.exp %203 : vector<16x4xf32>
    %cst_77 = arith.constant dense<0.000000e+00> : vector<16xf32>
    %205 = vector.multi_reduction <add>, %204, %cst_77 [1] : vector<16x4xf32> to vector<16xf32>
    %206 = vector.shape_cast %205 : vector<16xf32> to vector<16x1xf32>
    %207 = vector.broadcast %206 : vector<16x1xf32> to vector<16x4xf32>
    %208 = arith.divf %204, %207 : vector<16x4xf32>
    %209 = vector.extract_strided_slice %208 {offsets = [0, 0], sizes = [16, 1], strides = [1, 1]} : vector<16x4xf32> to vector<16x1xf32>
    %210 = vector.broadcast %209 : vector<16x1xf32> to vector<16x32xf32>
    %211 = arith.mulf %210, %88 : vector<16x32xf32>
    %212 = vector.extract_strided_slice %208 {offsets = [0, 1], sizes = [16, 1], strides = [1, 1]} : vector<16x4xf32> to vector<16x1xf32>
    %213 = vector.broadcast %212 : vector<16x1xf32> to vector<16x32xf32>
    %214 = arith.mulf %213, %89 : vector<16x32xf32>
    %215 = arith.addf %211, %214 : vector<16x32xf32>
    %216 = vector.extract_strided_slice %208 {offsets = [0, 2], sizes = [16, 1], strides = [1, 1]} : vector<16x4xf32> to vector<16x1xf32>
    %217 = vector.broadcast %216 : vector<16x1xf32> to vector<16x32xf32>
    %218 = arith.mulf %217, %90 : vector<16x32xf32>
    %219 = arith.addf %215, %218 : vector<16x32xf32>
    %220 = vector.extract_strided_slice %208 {offsets = [0, 3], sizes = [16, 1], strides = [1, 1]} : vector<16x4xf32> to vector<16x1xf32>
    %221 = vector.broadcast %220 : vector<16x1xf32> to vector<16x32xf32>
    %222 = arith.mulf %221, %91 : vector<16x32xf32>
    %223 = arith.addf %219, %222 : vector<16x32xf32>
    %c1_78 = arith.constant 1 : index
    %c0_79 = arith.constant 0 : index
    %c0_80 = arith.constant 0 : index
    %224 = vector.load %arg3[%c1_78, %c0_79, %c0_80] : memref<4x16x4xf32, #tpu.memory_space<vmem>>, vector<1x16x4xf32>
    %225 = vector.shape_cast %224 : vector<1x16x4xf32> to vector<16x4xf32>
    %cst_81 = arith.constant dense<0xFF800000> : vector<16xf32>
    %226 = vector.multi_reduction <maximumf>, %225, %cst_81 [1] : vector<16x4xf32> to vector<16xf32>
    %cst_82 = arith.constant 0xFF800000 : f32
    %227 = vector.broadcast %cst_82 : f32 to vector<16xf32>
    %228 = arith.maximumf %227, %226 : vector<16xf32>
    %229 = vector.shape_cast %228 : vector<16xf32> to vector<16x1xf32>
    %230 = vector.broadcast %229 : vector<16x1xf32> to vector<16x4xf32>
    %231 = arith.subf %225, %230 : vector<16x4xf32>
    %232 = math.exp %231 : vector<16x4xf32>
    %cst_83 = arith.constant dense<0.000000e+00> : vector<16xf32>
    %233 = vector.multi_reduction <add>, %232, %cst_83 [1] : vector<16x4xf32> to vector<16xf32>
    %234 = vector.shape_cast %233 : vector<16xf32> to vector<16x1xf32>
    %235 = vector.broadcast %234 : vector<16x1xf32> to vector<16x4xf32>
    %236 = arith.divf %232, %235 : vector<16x4xf32>
    %237 = vector.extract_strided_slice %236 {offsets = [0, 0], sizes = [16, 1], strides = [1, 1]} : vector<16x4xf32> to vector<16x1xf32>
    %238 = vector.broadcast %237 : vector<16x1xf32> to vector<16x32xf32>
    %239 = arith.mulf %238, %88 : vector<16x32xf32>
    %240 = vector.extract_strided_slice %236 {offsets = [0, 1], sizes = [16, 1], strides = [1, 1]} : vector<16x4xf32> to vector<16x1xf32>
    %241 = vector.broadcast %240 : vector<16x1xf32> to vector<16x32xf32>
    %242 = arith.mulf %241, %89 : vector<16x32xf32>
    %243 = arith.addf %239, %242 : vector<16x32xf32>
    %244 = vector.extract_strided_slice %236 {offsets = [0, 2], sizes = [16, 1], strides = [1, 1]} : vector<16x4xf32> to vector<16x1xf32>
    %245 = vector.broadcast %244 : vector<16x1xf32> to vector<16x32xf32>
    %246 = arith.mulf %245, %90 : vector<16x32xf32>
    %247 = arith.addf %243, %246 : vector<16x32xf32>
    %248 = vector.extract_strided_slice %236 {offsets = [0, 3], sizes = [16, 1], strides = [1, 1]} : vector<16x4xf32> to vector<16x1xf32>
    %249 = vector.broadcast %248 : vector<16x1xf32> to vector<16x32xf32>
    %250 = arith.mulf %249, %91 : vector<16x32xf32>
    %251 = arith.addf %247, %250 : vector<16x32xf32>
    %c2_84 = arith.constant 2 : index
    %c0_85 = arith.constant 0 : index
    %c0_86 = arith.constant 0 : index
    %252 = vector.load %arg3[%c2_84, %c0_85, %c0_86] : memref<4x16x4xf32, #tpu.memory_space<vmem>>, vector<1x16x4xf32>
    %253 = vector.shape_cast %252 : vector<1x16x4xf32> to vector<16x4xf32>
    %cst_87 = arith.constant dense<0xFF800000> : vector<16xf32>
    %254 = vector.multi_reduction <maximumf>, %253, %cst_87 [1] : vector<16x4xf32> to vector<16xf32>
    %cst_88 = arith.constant 0xFF800000 : f32
    %255 = vector.broadcast %cst_88 : f32 to vector<16xf32>
    %256 = arith.maximumf %255, %254 : vector<16xf32>
    %257 = vector.shape_cast %256 : vector<16xf32> to vector<16x1xf32>
    %258 = vector.broadcast %257 : vector<16x1xf32> to vector<16x4xf32>
    %259 = arith.subf %253, %258 : vector<16x4xf32>
    %260 = math.exp %259 : vector<16x4xf32>
    %cst_89 = arith.constant dense<0.000000e+00> : vector<16xf32>
    %261 = vector.multi_reduction <add>, %260, %cst_89 [1] : vector<16x4xf32> to vector<16xf32>
    %262 = vector.shape_cast %261 : vector<16xf32> to vector<16x1xf32>
    %263 = vector.broadcast %262 : vector<16x1xf32> to vector<16x4xf32>
    %264 = arith.divf %260, %263 : vector<16x4xf32>
    %265 = vector.extract_strided_slice %264 {offsets = [0, 0], sizes = [16, 1], strides = [1, 1]} : vector<16x4xf32> to vector<16x1xf32>
    %266 = vector.broadcast %265 : vector<16x1xf32> to vector<16x32xf32>
    %267 = arith.mulf %266, %88 : vector<16x32xf32>
    %268 = vector.extract_strided_slice %264 {offsets = [0, 1], sizes = [16, 1], strides = [1, 1]} : vector<16x4xf32> to vector<16x1xf32>
    %269 = vector.broadcast %268 : vector<16x1xf32> to vector<16x32xf32>
    %270 = arith.mulf %269, %89 : vector<16x32xf32>
    %271 = arith.addf %267, %270 : vector<16x32xf32>
    %272 = vector.extract_strided_slice %264 {offsets = [0, 2], sizes = [16, 1], strides = [1, 1]} : vector<16x4xf32> to vector<16x1xf32>
    %273 = vector.broadcast %272 : vector<16x1xf32> to vector<16x32xf32>
    %274 = arith.mulf %273, %90 : vector<16x32xf32>
    %275 = arith.addf %271, %274 : vector<16x32xf32>
    %276 = vector.extract_strided_slice %264 {offsets = [0, 3], sizes = [16, 1], strides = [1, 1]} : vector<16x4xf32> to vector<16x1xf32>
    %277 = vector.broadcast %276 : vector<16x1xf32> to vector<16x32xf32>
    %278 = arith.mulf %277, %91 : vector<16x32xf32>
    %279 = arith.addf %275, %278 : vector<16x32xf32>
    %c3_90 = arith.constant 3 : index
    %c0_91 = arith.constant 0 : index
    %c0_92 = arith.constant 0 : index
    %280 = vector.load %arg3[%c3_90, %c0_91, %c0_92] : memref<4x16x4xf32, #tpu.memory_space<vmem>>, vector<1x16x4xf32>
    %281 = vector.shape_cast %280 : vector<1x16x4xf32> to vector<16x4xf32>
    %cst_93 = arith.constant dense<0xFF800000> : vector<16xf32>
    %282 = vector.multi_reduction <maximumf>, %281, %cst_93 [1] : vector<16x4xf32> to vector<16xf32>
    %cst_94 = arith.constant 0xFF800000 : f32
    %283 = vector.broadcast %cst_94 : f32 to vector<16xf32>
    %284 = arith.maximumf %283, %282 : vector<16xf32>
    %285 = vector.shape_cast %284 : vector<16xf32> to vector<16x1xf32>
    %286 = vector.broadcast %285 : vector<16x1xf32> to vector<16x4xf32>
    %287 = arith.subf %281, %286 : vector<16x4xf32>
    %288 = math.exp %287 : vector<16x4xf32>
    %cst_95 = arith.constant dense<0.000000e+00> : vector<16xf32>
    %289 = vector.multi_reduction <add>, %288, %cst_95 [1] : vector<16x4xf32> to vector<16xf32>
    %290 = vector.shape_cast %289 : vector<16xf32> to vector<16x1xf32>
    %291 = vector.broadcast %290 : vector<16x1xf32> to vector<16x4xf32>
    %292 = arith.divf %288, %291 : vector<16x4xf32>
    %293 = vector.extract_strided_slice %292 {offsets = [0, 0], sizes = [16, 1], strides = [1, 1]} : vector<16x4xf32> to vector<16x1xf32>
    %294 = vector.broadcast %293 : vector<16x1xf32> to vector<16x32xf32>
    %295 = arith.mulf %294, %88 : vector<16x32xf32>
    %296 = vector.extract_strided_slice %292 {offsets = [0, 1], sizes = [16, 1], strides = [1, 1]} : vector<16x4xf32> to vector<16x1xf32>
    %297 = vector.broadcast %296 : vector<16x1xf32> to vector<16x32xf32>
    %298 = arith.mulf %297, %89 : vector<16x32xf32>
    %299 = arith.addf %295, %298 : vector<16x32xf32>
    %300 = vector.extract_strided_slice %292 {offsets = [0, 2], sizes = [16, 1], strides = [1, 1]} : vector<16x4xf32> to vector<16x1xf32>
    %301 = vector.broadcast %300 : vector<16x1xf32> to vector<16x32xf32>
    %302 = arith.mulf %301, %90 : vector<16x32xf32>
    %303 = arith.addf %299, %302 : vector<16x32xf32>
    %304 = vector.extract_strided_slice %292 {offsets = [0, 3], sizes = [16, 1], strides = [1, 1]} : vector<16x4xf32> to vector<16x1xf32>
    %305 = vector.broadcast %304 : vector<16x1xf32> to vector<16x32xf32>
    %306 = arith.mulf %305, %91 : vector<16x32xf32>
    %307 = arith.addf %303, %306 : vector<16x32xf32>
    %308 = tpu.concatenate %102, %123, %154, %195 in 0 : vector<16x32xf32>, vector<16x32xf32>, vector<16x32xf32>, vector<16x32xf32> -> vector<64x32xf32>
    %309 = tpu.concatenate %223, %251, %279, %307 in 0 : vector<16x32xf32>, vector<16x32xf32>, vector<16x32xf32>, vector<16x32xf32> -> vector<64x32xf32>
    %c0_96 = arith.constant 0 : index
    %c0_97 = arith.constant 0 : index
    %310 = vector.load %arg10[%c0_96, %c0_97] : memref<32x32xf32, #tpu.memory_space<vmem>>, vector<32x32xf32>
    %cst_98 = arith.constant dense<0.000000e+00> : vector<64x32xf32>
    %311 = tpu.matmul %308, %310, %cst_98 {dimension_numbers = #tpu.dot_dimension_numbers<[1], [0], [0], [1], [0, 0, 1, 1], [], []>} : vector<64x32xf32>, vector<32x32xf32>, vector<64x32xf32> -> vector<64x32xf32>
    %c0_99 = arith.constant 0 : index
    %c0_100 = arith.constant 0 : index
    %312 = vector.load %arg11[%c0_99, %c0_100] : memref<1x32xf32, #tpu.memory_space<vmem>>, vector<1x32xf32>
    %313 = vector.broadcast %312 : vector<1x32xf32> to vector<64x32xf32>
    %314 = arith.addf %311, %313 : vector<64x32xf32>
    %c0_101 = arith.constant 0 : index
    %c0_102 = arith.constant 0 : index
    %315 = vector.load %arg14[%c0_101, %c0_102] : memref<32x32xf32, #tpu.memory_space<vmem>>, vector<32x32xf32>
    %cst_103 = arith.constant dense<0.000000e+00> : vector<64x32xf32>
    %316 = tpu.matmul %309, %315, %cst_103 {dimension_numbers = #tpu.dot_dimension_numbers<[1], [0], [0], [1], [0, 0, 1, 1], [], []>} : vector<64x32xf32>, vector<32x32xf32>, vector<64x32xf32> -> vector<64x32xf32>
    %c0_104 = arith.constant 0 : index
    %c0_105 = arith.constant 0 : index
    %317 = vector.load %arg15[%c0_104, %c0_105] : memref<1x32xf32, #tpu.memory_space<vmem>>, vector<1x32xf32>
    %318 = vector.broadcast %317 : vector<1x32xf32> to vector<64x32xf32>
    %319 = arith.addf %316, %318 : vector<64x32xf32>
    %cst_106 = arith.constant 0.000000e+00 : f32
    %320 = vector.broadcast %cst_106 : f32 to vector<64x32xf32>
    %321 = arith.maximumf %314, %320 : vector<64x32xf32>
    %322 = arith.addf %321, %308 : vector<64x32xf32>
    %323 = vector.broadcast %0 : f32 to vector<64x32xf32>
    %324 = arith.mulf %323, %322 : vector<64x32xf32>
    %325 = arith.addf %324, %66 : vector<64x32xf32>
    %cst_107 = arith.constant 0.000000e+00 : f32
    %326 = vector.broadcast %cst_107 : f32 to vector<64x32xf32>
    %327 = arith.maximumf %319, %326 : vector<64x32xf32>
    %328 = arith.addf %327, %309 : vector<64x32xf32>
    %329 = vector.broadcast %1 : f32 to vector<64x32xf32>
    %330 = arith.mulf %329, %328 : vector<64x32xf32>
    %331 = arith.addf %330, %67 : vector<64x32xf32>
    %332 = vector.extract_strided_slice %325 {offsets = [0, 0], sizes = [16, 32], strides = [1, 1]} : vector<64x32xf32> to vector<16x32xf32>
    %333 = vector.extract_strided_slice %331 {offsets = [0, 0], sizes = [16, 32], strides = [1, 1]} : vector<64x32xf32> to vector<16x32xf32>
    %334 = vector.extract_strided_slice %325 {offsets = [16, 0], sizes = [16, 32], strides = [1, 1]} : vector<64x32xf32> to vector<16x32xf32>
    %335 = vector.extract_strided_slice %331 {offsets = [16, 0], sizes = [16, 32], strides = [1, 1]} : vector<64x32xf32> to vector<16x32xf32>
    %336 = vector.extract_strided_slice %325 {offsets = [32, 0], sizes = [16, 32], strides = [1, 1]} : vector<64x32xf32> to vector<16x32xf32>
    %337 = vector.extract_strided_slice %331 {offsets = [32, 0], sizes = [16, 32], strides = [1, 1]} : vector<64x32xf32> to vector<16x32xf32>
    %338 = vector.extract_strided_slice %325 {offsets = [48, 0], sizes = [16, 32], strides = [1, 1]} : vector<64x32xf32> to vector<16x32xf32>
    %339 = vector.extract_strided_slice %331 {offsets = [48, 0], sizes = [16, 32], strides = [1, 1]} : vector<64x32xf32> to vector<16x32xf32>
    %340 = tpu.concatenate %332, %333, %334, %335, %336, %337, %338, %339 in 1 : vector<16x32xf32>, vector<16x32xf32>, vector<16x32xf32>, vector<16x32xf32>, vector<16x32xf32>, vector<16x32xf32>, vector<16x32xf32>, vector<16x32xf32> -> vector<16x256xf32>
    %c0_108 = arith.constant 0 : index
    %c0_109 = arith.constant 0 : index
    %341 = vector.load %arg17[%c0_108, %c0_109] : memref<16x256xf32, #tpu.memory_space<vmem>>, vector<16x256xf32>
    tpu.vector_store %arg17[%c0_108, %c0_109], %340 {strides = array<i32>} : memref<16x256xf32, #tpu.memory_space<vmem>>, vector<16x256xf32>,
    return
  }
  func.func @transform_0(%arg0: i32) -> (i32, i32, i32) {
    %c0_i32 = arith.constant 0 : i32
    %c0_i32_0 = arith.constant 0 : i32
    %c0_i32_1 = arith.constant 0 : i32
    %c0_i32_2 = arith.constant 0 : i32
    return %c0_i32, %c0_i32_0, %c0_i32_1 : i32, i32, i32
  }
  func.func @transform_1(%arg0: i32) -> (i32, i32, i32) {
    %c0_i32 = arith.constant 0 : i32
    %c0_i32_0 = arith.constant 0 : i32
    %c0_i32_1 = arith.constant 0 : i32
    %c0_i32_2 = arith.constant 0 : i32
    return %c0_i32, %c0_i32_0, %c0_i32_1 : i32, i32, i32
  }
  func.func @transform_2(%arg0: i32) -> (i32, i32, i32) {
    %c0_i32 = arith.constant 0 : i32
    %c0_i32_0 = arith.constant 0 : i32
    %c0_i32_1 = arith.constant 0 : i32
    %c0_i32_2 = arith.constant 0 : i32
    return %c0_i32, %c0_i32_0, %c0_i32_1 : i32, i32, i32
  }
  func.func @transform_3(%arg0: i32) -> (i32, i32) {
    %c0_i32 = arith.constant 0 : i32
    %c0_i32_0 = arith.constant 0 : i32
    %c0_i32_1 = arith.constant 0 : i32
    return %c0_i32, %c0_i32_0 : i32, i32
  }
  func.func @transform_4(%arg0: i32) -> (i32, i32) {
    %c0_i32 = arith.constant 0 : i32
    %c0_i32_0 = arith.constant 0 : i32
    %c0_i32_1 = arith.constant 0 : i32
    return %c0_i32, %c0_i32_0 : i32, i32
  }
  func.func @transform_5(%arg0: i32) -> (i32, i32) {
    %c0_i32 = arith.constant 0 : i32
    %c0_i32_0 = arith.constant 0 : i32
    %c0_i32_1 = arith.constant 0 : i32
    return %c0_i32, %c0_i32_0 : i32, i32
  }
  func.func @transform_6(%arg0: i32) -> (i32, i32) {
    %c0_i32 = arith.constant 0 : i32
    %c0_i32_0 = arith.constant 0 : i32
    %c0_i32_1 = arith.constant 0 : i32
    return %c0_i32, %c0_i32_0 : i32, i32
  }
  func.func @transform_7(%arg0: i32) -> (i32, i32) {
    %c0_i32 = arith.constant 0 : i32
    %c0_i32_0 = arith.constant 0 : i32
    %c0_i32_1 = arith.constant 0 : i32
    return %c0_i32, %c0_i32_0 : i32, i32
  }
  func.func @transform_8(%arg0: i32) -> (i32, i32) {
    %c0_i32 = arith.constant 0 : i32
    %c0_i32_0 = arith.constant 0 : i32
    %c0_i32_1 = arith.constant 0 : i32
    return %c0_i32, %c0_i32_0 : i32, i32
  }
  func.func @transform_9(%arg0: i32) -> (i32, i32) {
    %c0_i32 = arith.constant 0 : i32
    %c0_i32_0 = arith.constant 0 : i32
    %c0_i32_1 = arith.constant 0 : i32
    return %c0_i32, %c0_i32_0 : i32, i32
  }
  func.func @transform_10(%arg0: i32) -> (i32, i32) {
    %c0_i32 = arith.constant 0 : i32
    %c0_i32_0 = arith.constant 0 : i32
    %c0_i32_1 = arith.constant 0 : i32
    return %c0_i32, %c0_i32_0 : i32, i32
  }
  func.func @transform_11(%arg0: i32) -> (i32, i32) {
    %c0_i32 = arith.constant 0 : i32
    %c0_i32_0 = arith.constant 0 : i32
    %c0_i32_1 = arith.constant 0 : i32
    return %c0_i32, %c0_i32_0 : i32, i32
  }
  func.func @transform_12(%arg0: i32) -> (i32, i32) {
    %c0_i32 = arith.constant 0 : i32
    %c0_i32_0 = arith.constant 0 : i32
    %c0_i32_1 = arith.constant 0 : i32
    return %c0_i32, %c0_i32_0 : i32, i32
  }
  func.func @transform_13(%arg0: i32) -> (i32, i32) {
    %c0_i32 = arith.constant 0 : i32
    %c0_i32_0 = arith.constant 0 : i32
    %c0_i32_1 = arith.constant 0 : i32
    return %c0_i32, %c0_i32_0 : i32, i32
  }
  func.func @transform_14(%arg0: i32) -> (i32, i32) {
    %c0_i32 = arith.constant 0 : i32
    %c0_i32_0 = arith.constant 0 : i32
    %c0_i32_1 = arith.constant 0 : i32
    return %c0_i32, %c0_i32_0 : i32, i32
  }
  func.func @transform_15(%arg0: i32) -> i32 {
    %c0_i32 = arith.constant 0 : i32
    %c0_i32_0 = arith.constant 0 : i32
    return %c0_i32 : i32
  }
  func.func @transform_16(%arg0: i32) -> (i32, i32) {
    %c0_i32 = arith.constant 0 : i32
    %c0_i32_0 = arith.constant 0 : i32
    %c0_i32_1 = arith.constant 0 : i32
    return %c0_i32, %c0_i32_0 : i32, i32
  }
}

</mosaic_0001>

<llo_original>
// kernel: tpu_custom_call.1
$region0: #{tpu_custom_call.1}
  #allocation0 [shape = 'u32[]', space=smem, size = 0x4, offset = 0x4, fixed_abs, tag = 'smem constant byte address 0x4 - core index']
  #allocation1 [shape = 'u32[144,128]{1,0:T(1,128)}', space=vmem, size = 0x12000, scoped, tag = 'internal scratch']
  %s0 = inlined_call_operand.vmem [shape: f32[4,16,32], index: 0, kind: input, shape index: {}]
  %s1 = inlined_call_operand.hbm [shape: f32[4,16,16], index: 1, kind: input, shape index: {}]
  %s2 = inlined_call_operand.vmem [shape: f32[4,16,4], index: 2, kind: input, shape index: {}]
  %s3 = inlined_call_operand.hbm [shape: f32[32,32], index: 3, kind: input, shape index: {}]
  %s4 = inlined_call_operand.vmem [shape: f32[1,32], index: 4, kind: input, shape index: {}]
  %s5 = inlined_call_operand.hbm [shape: f32[4,32], index: 5, kind: input, shape index: {}]
  %s6 = inlined_call_operand.vmem [shape: f32[32,32], index: 6, kind: input, shape index: {}]
  %s7 = inlined_call_operand.hbm [shape: f32[32,32], index: 7, kind: input, shape index: {}]
  %s8 = inlined_call_operand.hbm [shape: f32[32,32], index: 8, kind: input, shape index: {}]
  %s9 = inlined_call_operand.hbm [shape: f32[32,32], index: 9, kind: input, shape index: {}]
  %s10 = inlined_call_operand.hbm [shape: f32[1,32], index: 10, kind: input, shape index: {}]
  %s11 = inlined_call_operand.hbm [shape: f32[4,32], index: 11, kind: input, shape index: {}]
  %s12 = inlined_call_operand.hbm [shape: f32[32,32], index: 12, kind: input, shape index: {}]
  %s13 = inlined_call_operand.vmem [shape: f32[32,32], index: 13, kind: input, shape index: {}]
  %s14 = inlined_call_operand.vmem [shape: f32[1,32], index: 14, kind: input, shape index: {}]
  %s15 = inlined_call_operand.vmem [shape: f32[2], index: 15, kind: input, shape index: {}]
  %s16 = inlined_call_operand.hbm [shape: f32[16,256], index: 16, kind: output, shape index: {}]
  %s17 = sld [smem:[#allocation0]]
  $region114: #{tpu_custom_call.1} parent=0
    _
  %s19 = ssub.s32 1, %s17
  %s20 = scalar_select 0, %s19, %s17
  $region1: #{tpu_custom_call.1} parent=0
    #allocation2 [shape = 'u8[32768]{0}', space=vmem, size = 0x8000, scoped, tag = 'input window, operand 1, single buffered']
    #allocation3 [shape = 's32[1]{0}', space=sflag, size = 0x4, scoped, tag = 'scoped memory for tpu_custom_call.1']
    #allocation4 [shape = 's32[1]{0}', space=sflag, size = 0x4, scoped, tag = 'scoped memory for tpu_custom_call.1']
    #allocation5 [shape = 's32[1]{0}', space=sflag, size = 0x4, scoped, tag = 'scoped memory for tpu_custom_call.1']
    #allocation6 [shape = 'u8[16384]{0}', space=vmem, size = 0x4000, scoped, tag = 'input window, operand 3, single buffered']
    #allocation7 [shape = 's32[1]{0}', space=sflag, size = 0x4, scoped, tag = 'scoped memory for tpu_custom_call.1']
    #allocation8 [shape = 'u8[2048]{0}', space=vmem, size = 0x800, scoped, tag = 'input window, operand 5, single buffered']
    #allocation9 [shape = 'u8[16384]{0}', space=vmem, size = 0x4000, scoped, tag = 'input window, operand 7, single buffered']
    #allocation10 [shape = 's32[1]{0}', space=sflag, size = 0x4, scoped, tag = 'scoped memory for tpu_custom_call.1']
    #allocation11 [shape = 'u8[16384]{0}', space=vmem, size = 0x4000, scoped, tag = 'input window, operand 8, single buffered']
    #allocation12 [shape = 'u8[16384]{0}', space=vmem, size = 0x4000, scoped, tag = 'input window, operand 9, single buffered']
    #allocation13 [shape = 's32[1]{0}', space=sflag, size = 0x4, scoped, tag = 'scoped memory for tpu_custom_call.1']
    #allocation14 [shape = 'u8[512]{0}', space=vmem, size = 0x400, scoped, tag = 'input window, operand 10, single buffered']
    #allocation15 [shape = 'u8[2048]{0}', space=vmem, size = 0x800, scoped, tag = 'input window, operand 11, single buffered']
    #allocation16 [shape = 's32[1]{0}', space=sflag, size = 0x4, scoped, tag = 'scoped memory for tpu_custom_call.1']
    #allocation17 [shape = 'u8[16384]{0}', space=vmem, size = 0x4000, scoped, tag = 'input window, operand 12, single buffered']
    #allocation18 [shape = 'u8[512]{0}', space=smem, size = 0x200, scoped, tag = 'input window, operand 15, single buffered']
    #allocation19 [shape = 'u8[16384]{0}', space=vmem, size = 0x4000, scoped, tag = 'output window, operand 0, single buffered']
    %21 = vsyncpa [#allocation3], 0
    %22 = vsyncpa [#allocation7], 0
    %23 = vsyncpa [#allocation10], 0
    %24 = vsyncpa [#allocation13], 0
    %25 = vsyncpa [#allocation16], 0
    %26 = vsyncpa [#allocation5], 0
    %27 = vsyncpa [#allocation4], 0
    // Predicated region
    $region2: #{tpu_custom_call.1} parent=1 // pred_check
      _
    $region3: #{tpu_custom_call.1} parent=1 // pred_check_branch
      %29 = sbr.rel (0) target = $region5
    $region4: #{tpu_custom_call.1} parent=1 // pred_region
      _
    $region5: #{tpu_custom_call.1} parent=1 // pred_fallthru
      _
    // Predicated region
    $region6: #{tpu_custom_call.1} parent=1 // pred_check
      _
    $region7: #{tpu_custom_call.1} parent=1 // pred_check_branch
      %31 = sbr.rel (0) target = $region9
    $region8: #{tpu_custom_call.1} parent=1 // pred_region
      %s33 = ssub.s32 1024, 1024
      %34 = vsyncadd [#allocation3], %s33
      %s35 = sshll.u32 [#allocation2], 4
      %s36 = int_to_ptr.vmem [resolvable:$true] %s35
      %41 = dma.hbm_to_vmem [thread:$0]  %s1, 1024, %s36, [#allocation3], 128, 128, 8
    $region9: #{tpu_custom_call.1} parent=1 // pred_fallthru
      _
    // Predicated region
    $region10: #{tpu_custom_call.1} parent=1 // pred_check
      _
    $region11: #{tpu_custom_call.1} parent=1 // pred_check_branch
      %43 = sbr.rel (0) target = $region13
    $region12: #{tpu_custom_call.1} parent=1 // pred_region
      _
    $region13: #{tpu_custom_call.1} parent=1 // pred_fallthru
      _
    // Predicated region
    $region14: #{tpu_custom_call.1} parent=1 // pred_check
      _
    $region15: #{tpu_custom_call.1} parent=1 // pred_check_branch
      %45 = sbr.rel (0) target = $region17
    $region16: #{tpu_custom_call.1} parent=1 // pred_region
      %s47 = ssub.s32 512, 512
      %48 = vsyncadd [#allocation7], %s47
      %s49 = sshll.u32 [#allocation6], 4
      %s50 = int_to_ptr.vmem [resolvable:$true] %s49
      %55 = dma.hbm_to_vmem [thread:$0]  %s3, 512, %s50, [#allocation7], 128, 128, 8
    $region17: #{tpu_custom_call.1} parent=1 // pred_fallthru
      _
    // Predicated region
    $region18: #{tpu_custom_call.1} parent=1 // pred_check
      _
    $region19: #{tpu_custom_call.1} parent=1 // pred_check_branch
      %57 = sbr.rel (0) target = $region21
    $region20: #{tpu_custom_call.1} parent=1 // pred_region
      _
    $region21: #{tpu_custom_call.1} parent=1 // pred_fallthru
      _
    // Predicated region
    $region22: #{tpu_custom_call.1} parent=1 // pred_check
      _
    $region23: #{tpu_custom_call.1} parent=1 // pred_check_branch
      %59 = sbr.rel (0) target = $region25
    $region24: #{tpu_custom_call.1} parent=1 // pred_region
      %s61 = ssub.s32 64, 64
      %62 = vsyncadd [#allocation7], %s61
      %s64 = sshll.u32 [#allocation8], 4
      %s65 = int_to_ptr.vmem [resolvable:$true] %s64
      %67 = dma.hbm_to_vmem [thread:$0]  %s5, 64, %s65, [#allocation7]
    $region25: #{tpu_custom_call.1} parent=1 // pred_fallthru
      _
    // Predicated region
    $region26: #{tpu_custom_call.1} parent=1 // pred_check
      _
    $region27: #{tpu_custom_call.1} parent=1 // pred_check_branch
      %69 = sbr.rel (0) target = $region29
    $region28: #{tpu_custom_call.1} parent=1 // pred_region
      _
    $region29: #{tpu_custom_call.1} parent=1 // pred_fallthru
      _
    // Predicated region
    $region30: #{tpu_custom_call.1} parent=1 // pred_check
      _
    $region31: #{tpu_custom_call.1} parent=1 // pred_check_branch
      %71 = sbr.rel (0) target = $region33
    $region32: #{tpu_custom_call.1} parent=1 // pred_region
      %s73 = ssub.s32 512, 512
      %74 = vsyncadd [#allocation10], %s73
      %s75 = sshll.u32 [#allocation9], 4
      %s76 = int_to_ptr.vmem [resolvable:$true] %s75
      %81 = dma.hbm_to_vmem [thread:$0]  %s7, 512, %s76, [#allocation10], 128, 128, 8
    $region33: #{tpu_custom_call.1} parent=1 // pred_fallthru
      _
    // Predicated region
    $region34: #{tpu_custom_call.1} parent=1 // pred_check
      _
    $region35: #{tpu_custom_call.1} parent=1 // pred_check_branch
      %83 = sbr.rel (0) target = $region37
    $region36: #{tpu_custom_call.1} parent=1 // pred_region
      %s85 = ssub.s32 512, 512
      %86 = vsyncadd [#allocation10], %s85
      %s87 = sshll.u32 [#allocation11], 4
      %s88 = int_to_ptr.vmem [resolvable:$true] %s87
      %93 = dma.hbm_to_vmem [thread:$0]  %s8, 512, %s88, [#allocation10], 128, 128, 8
    $region37: #{tpu_custom_call.1} parent=1 // pred_fallthru
      _
    // Predicated region
    $region38: #{tpu_custom_call.1} parent=1 // pred_check
      _
    $region39: #{tpu_custom_call.1} parent=1 // pred_check_branch
      %95 = sbr.rel (0) target = $region41
    $region40: #{tpu_custom_call.1} parent=1 // pred_region
      %s97 = ssub.s32 512, 512
      %98 = vsyncadd [#allocation13], %s97
      %s99 = sshll.u32 [#allocation12], 4
      %s100 = int_to_ptr.vmem [resolvable:$true] %s99
      %105 = dma.hbm_to_vmem [thread:$0]  %s9, 512, %s100, [#allocation13], 128, 128, 8
    $region41: #{tpu_custom_call.1} parent=1 // pred_fallthru
      _
    // Predicated region
    $region42: #{tpu_custom_call.1} parent=1 // pred_check
      _
    $region43: #{tpu_custom_call.1} parent=1 // pred_check_branch
      %107 = sbr.rel (0) target = $region45
    $region44: #{tpu_custom_call.1} parent=1 // pred_region
      %s109 = ssub.s32 16, 16
      %110 = vsyncadd [#allocation13], %s109
      %s112 = sshll.u32 [#allocation14], 4
      %s113 = int_to_ptr.vmem [resolvable:$true] %s112
      %115 = dma.hbm_to_vmem [thread:$0]  %s10, 16, %s113, [#allocation13]
    $region45: #{tpu_custom_call.1} parent=1 // pred_fallthru
      _
    // Predicated region
    $region46: #{tpu_custom_call.1} parent=1 // pred_check
      _
    $region47: #{tpu_custom_call.1} parent=1 // pred_check_branch
      %117 = sbr.rel (0) target = $region49
    $region48: #{tpu_custom_call.1} parent=1 // pred_region
      %s119 = ssub.s32 64, 64
      %120 = vsyncadd [#allocation16], %s119
      %s122 = sshll.u32 [#allocation15], 4
      %s123 = int_to_ptr.vmem [resolvable:$true] %s122
      %125 = dma.hbm_to_vmem [thread:$0]  %s11, 64, %s123, [#allocation16]
    $region49: #{tpu_custom_call.1} parent=1 // pred_fallthru
      _
    // Predicated region
    $region50: #{tpu_custom_call.1} parent=1 // pred_check
      _
    $region51: #{tpu_custom_call.1} parent=1 // pred_check_branch
      %127 = sbr.rel (0) target = $region53
    $region52: #{tpu_custom_call.1} parent=1 // pred_region
      %s129 = ssub.s32 512, 512
      %130 = vsyncadd [#allocation16], %s129
      %s131 = sshll.u32 [#allocation17], 4
      %s132 = int_to_ptr.vmem [resolvable:$true] %s131
      %137 = dma.hbm_to_vmem [thread:$0]  %s12, 512, %s132, [#allocation16], 128, 128, 8
    $region53: #{tpu_custom_call.1} parent=1 // pred_fallthru
      _
    // Predicated region
    $region54: #{tpu_custom_call.1} parent=1 // pred_check
      _
    $region55: #{tpu_custom_call.1} parent=1 // pred_check_branch
      %139 = sbr.rel (0) target = $region57
    $region56: #{tpu_custom_call.1} parent=1 // pred_region
      _
    $region57: #{tpu_custom_call.1} parent=1 // pred_fallthru
      _
    // Predicated region
    $region58: #{tpu_custom_call.1} parent=1 // pred_check
      _
    $region59: #{tpu_custom_call.1} parent=1 // pred_check_branch
      %141 = sbr.rel (0) target = $region61
    $region60: #{tpu_custom_call.1} parent=1 // pred_region
      _
    $region61: #{tpu_custom_call.1} parent=1 // pred_fallthru
      _
    // Predicated region
    $region62: #{tpu_custom_call.1} parent=1 // pred_check
      _
    $region63: #{tpu_custom_call.1} parent=1 // pred_check_branch
      %143 = sbr.rel (0) target = $region65
    $region64: #{tpu_custom_call.1} parent=1 // pred_region
      %s145 = ssub.s32 16, 16
      %146 = vsyncadd [#allocation5], %s145
      %s148 = sshll.u32 %s15, 4
      %s149 = int_to_ptr.vmem [resolvable:$true] %s148
      %151 = dma.vmem_to_smem %s149, 16, [#allocation18], [#allocation5]
    $region65: #{tpu_custom_call.1} parent=1 // pred_fallthru
      _
    // Predicated region
    $region66: #{tpu_custom_call.1} parent=1 // pred_check
      _
    $region67: #{tpu_custom_call.1} parent=1 // pred_check_branch
      %153 = sbr.rel (0) target = $region69
    $region68: #{tpu_custom_call.1} parent=1 // pred_region
      %154 = dma.done [#allocation3], 1024
    $region69: #{tpu_custom_call.1} parent=1 // pred_fallthru
      _
    // Predicated region
    $region70: #{tpu_custom_call.1} parent=1 // pred_check
      _
    $region71: #{tpu_custom_call.1} parent=1 // pred_check_branch
      %156 = sbr.rel (0) target = $region73
    $region72: #{tpu_custom_call.1} parent=1 // pred_region
      %157 = dma.done [#allocation7], 512
    $region73: #{tpu_custom_call.1} parent=1 // pred_fallthru
      _
    // Predicated region
    $region74: #{tpu_custom_call.1} parent=1 // pred_check
      _
    $region75: #{tpu_custom_call.1} parent=1 // pred_check_branch
      %159 = sbr.rel (0) target = $region77
    $region76: #{tpu_custom_call.1} parent=1 // pred_region
      %160 = dma.done [#allocation7], 64
    $region77: #{tpu_custom_call.1} parent=1 // pred_fallthru
      _
    // Predicated region
    $region78: #{tpu_custom_call.1} parent=1 // pred_check
      _
    $region79: #{tpu_custom_call.1} parent=1 // pred_check_branch
      %162 = sbr.rel (0) target = $region81
    $region80: #{tpu_custom_call.1} parent=1 // pred_region
      %163 = dma.done [#allocation10], 512
    $region81: #{tpu_custom_call.1} parent=1 // pred_fallthru
      _
    // Predicated region
    $region82: #{tpu_custom_call.1} parent=1 // pred_check
      _
    $region83: #{tpu_custom_call.1} parent=1 // pred_check_branch
      %165 = sbr.rel (0) target = $region85
    $region84: #{tpu_custom_call.1} parent=1 // pred_region
      %166 = dma.done [#allocation10], 512
    $region85: #{tpu_custom_call.1} parent=1 // pred_fallthru
      _
    // Predicated region
    $region86: #{tpu_custom_call.1} parent=1 // pred_check
      _
    $region87: #{tpu_custom_call.1} parent=1 // pred_check_branch
      %168 = sbr.rel (0) target = $region89
    $region88: #{tpu_custom_call.1} parent=1 // pred_region
      %169 = dma.done [#allocation13], 512
    $region89: #{tpu_custom_call.1} parent=1 // pred_fallthru
      _
    // Predicated region
    $region90: #{tpu_custom_call.1} parent=1 // pred_check
      _
    $region91: #{tpu_custom_call.1} parent=1 // pred_check_branch
      %171 = sbr.rel (0) target = $region93
    $region92: #{tpu_custom_call.1} parent=1 // pred_region
      %172 = dma.done [#allocation13], 16
    $region93: #{tpu_custom_call.1} parent=1 // pred_fallthru
      _
    // Predicated region
    $region94: #{tpu_custom_call.1} parent=1 // pred_check
      _
    $region95: #{tpu_custom_call.1} parent=1 // pred_check_branch
      %174 = sbr.rel (0) target = $region97
    $region96: #{tpu_custom_call.1} parent=1 // pred_region
      %175 = dma.done [#allocation16], 64
    $region97: #{tpu_custom_call.1} parent=1 // pred_fallthru
      _
    // Predicated region
    $region98: #{tpu_custom_call.1} parent=1 // pred_check
      _
    $region99: #{tpu_custom_call.1} parent=1 // pred_check_branch
      %177 = sbr.rel (0) target = $region101
    $region100: #{tpu_custom_call.1} parent=1 // pred_region
      %178 = dma.done [#allocation16], 512
    $region101: #{tpu_custom_call.1} parent=1 // pred_fallthru
      _
    // Predicated region
    $region102: #{tpu_custom_call.1} parent=1 // pred_check
      _
    $region103: #{tpu_custom_call.1} parent=1 // pred_check_branch
      %180 = sbr.rel (0) target = $region105
    $region104: #{tpu_custom_call.1} parent=1 // pred_region
      %181 = dma.done [#allocation5], 16
    $region105: #{tpu_custom_call.1} parent=1 // pred_fallthru
      _
    %182 = sfence
    %s183 = sld [smem:[#allocation18]]
    %s184 = sld [smem:[#allocation18 + $0x1]]
    %v185 = vld [vmem:[%s0] sm:$0xff]
    %v186 = vld [vmem:[%s0 + $0x8] sm:$0xff]
    %s187 = scalar_lea.vmem %s0, 16
    %v188 = vld [vmem:[%s187] sm:$0xff]
    %v189 = vld [vmem:[%s187 + $0x8] sm:$0xff]
    %s190 = scalar_lea.vmem %s0, 32
    %v191 = vld [vmem:[%s190] sm:$0xff]
    %v192 = vld [vmem:[%s190 + $0x8] sm:$0xff]
    %s193 = scalar_lea.vmem %s0, 48
    %v194 = vld [vmem:[%s193] sm:$0xff]
    %v195 = vld [vmem:[%s193 + $0x8] sm:$0xff]
    %v196 = vld [vmem:[#allocation6] sm:$0xff]
    %v197 = vld [vmem:[#allocation6 + $0x8] sm:$0xff]
    %v198 = vld [vmem:[#allocation6 + $0x10] sm:$0xff]
    %v199 = vld [vmem:[#allocation6 + $0x18] sm:$0xff]
    %vm200 = vcmask 261120
    %v202 = vsel %vm200, %v185, 0
    %v205 = vsel %vm200, %v186, 0
    %v208 = vsel %vm200, %v188, 0
    %v211 = vsel %vm200, %v189, 0
    %v214 = vsel %vm200, %v191, 0
    %v217 = vsel %vm200, %v192, 0
    %v220 = vsel %vm200, %v194, 0
    %v223 = vsel %vm200, %v195, 0
    %225 = vmatprep.subr.mxu0 0.0
    %226 = vmatpush1.msra.mxu0 %v196
    %227 = vmatprep.subr.mxu0 0.0
    %228 = vmatpush1.msra.mxu0 %v197
    %229 = vmatprep.subr.mxu0 0.0
    %230 = vmatpush1.msra.mxu0 %v198
    %231 = vmatprep.subr.mxu0 0.0
    %232 = vmatpush1.msra.mxu0 %v199
    %233 = vmatprep.subr.mxu0 0.0
    %234 = vmatpush1.msra.mxu0 0.0
    %235 = vmatprep.subr.mxu0 0.0
    %236 = vmatpush1.msra.mxu0 0.0
    %237 = vmatprep.subr.mxu0 0.0
    %238 = vmatpush1.msra.mxu0 0.0
    %239 = vmatprep.subr.mxu0 0.0
    %240 = vmatpush1.msra.mxu0 0.0
    %241 = vmatprep.subr.mxu0 0.0
    %242 = vmatpush1.msra.mxu0 0.0
    %243 = vmatprep.subr.mxu0 0.0
    %244 = vmatpush1.msra.mxu0 0.0
    %245 = vmatprep.subr.mxu0 0.0
    %246 = vmatpush1.msra.mxu0 0.0
    %247 = vmatprep.subr.mxu0 0.0
    %248 = vmatpush1.msra.mxu0 0.0
    %249 = vmatprep.subr.mxu0 0.0
    %250 = vmatpush1.msra.mxu0 0.0
    %251 = vmatprep.subr.mxu0 0.0
    %252 = vmatpush1.msra.mxu0 0.0
    %253 = vmatprep.subr.mxu0 0.0
    %254 = vmatpush1.msra.mxu0 0.0
    %255 = vmatprep.subr.mxu0 0.0
    %256 = vmatpush1.msra.mxu0 0.0
    %257 = vmatprep.subr.mxu0 0.0
    %258 = vmatpush1.msra.mxu0 0.0
    %259 = vmatprep.subr.mxu0 0.0
    %260 = vmatpush1.msra.mxu0 0.0
    %261 = vmatprep.subr.mxu0 0.0
    %262 = vmatpush1.msra.mxu0 0.0
    %263 = vmatprep.subr.mxu0 0.0
    %264 = vmatpush1.msra.mxu0 0.0
    %265 = vmatprep.subr.mxu0 0.0
    %266 = vmatpush1.msra.mxu0 0.0
    %267 = vmatprep.subr.mxu0 0.0
    %268 = vmatpush1.msra.mxu0 0.0
    %269 = vmatprep.subr.mxu0 0.0
    %270 = vmatpush1.msra.mxu0 0.0
    %271 = vmatprep.subr.mxu0 0.0
    %272 = vmatpush1.msra.mxu0 0.0
    %273 = vmatprep.subr.mxu0 0.0
    %274 = vmatpush1.msra.mxu0 0.0
    %275 = vmatprep.subr.mxu0 0.0
    %276 = vmatpush1.msra.mxu0 0.0
    %277 = vmatprep.subr.mxu0 0.0
    %278 = vmatpush1.msra.mxu0 0.0
    %279 = vmatprep.subr.mxu0 0.0
    %280 = vmatpush1.msra.mxu0 0.0
    %281 = vmatprep.subr.mxu0 0.0
    %282 = vmatpush1.msra.mxu0 0.0
    %283 = vmatprep.subr.mxu0 0.0
    %284 = vmatpush1.msra.mxu0 0.0
    %285 = vmatprep.subr.mxu0 0.0
    %286 = vmatpush1.msra.mxu0 0.0
    %287 = vmatprep.subr.mxu0 0.0
    %288 = vmatpush1.msra.mxu0 0.0
    %289 = vmatprep.mubr.f32.mxu0 0.0
    %290 = vmatmul.mubr.f32.gmra.mrb[0].mxu0 %v202
    %v291 = vpop.f32.mrb[0].mxu0
    %v292 = vadd.f32 0.0, %v291
    %v293 = vpop.f32.mrb[0].mxu0
    %294 = vmatprep.mubr.f32.mxu0 0.0
    %295 = vmatmul.mubr.f32.gmra.mrb[0].mxu0 %v205
    %v296 = vpop.f32.mrb[0].mxu0
    %v297 = vadd.f32 0.0, %v296
    %v298 = vpop.f32.mrb[0].mxu0
    %299 = vmatprep.mubr.f32.mxu0 0.0
    %300 = vmatmul.mubr.f32.gmra.mrb[0].mxu0 %v208
    %v301 = vpop.f32.mrb[0].mxu0
    %v302 = vadd.f32 0.0, %v301
    %v303 = vpop.f32.mrb[0].mxu0
    %304 = vmatprep.mubr.f32.mxu0 0.0
    %305 = vmatmul.mubr.f32.gmra.mrb[0].mxu0 %v211
    %v306 = vpop.f32.mrb[0].mxu0
    %v307 = vadd.f32 0.0, %v306
    %v308 = vpop.f32.mrb[0].mxu0
    %309 = vmatprep.mubr.f32.mxu0 0.0
    %310 = vmatmul.mubr.f32.gmra.mrb[0].mxu0 %v214
    %v311 = vpop.f32.mrb[0].mxu0
    %v312 = vadd.f32 0.0, %v311
    %v313 = vpop.f32.mrb[0].mxu0
    %314 = vmatprep.mubr.f32.mxu0 0.0
    %315 = vmatmul.mubr.f32.gmra.mrb[0].mxu0 %v217
    %v316 = vpop.f32.mrb[0].mxu0
    %v317 = vadd.f32 0.0, %v316
    %v318 = vpop.f32.mrb[0].mxu0
    %319 = vmatprep.mubr.f32.mxu0 0.0
    %320 = vmatmul.mubr.f32.gmra.mrb[0].mxu0 %v220
    %v321 = vpop.f32.mrb[0].mxu0
    %v322 = vadd.f32 0.0, %v321
    %v323 = vpop.f32.mrb[0].mxu0
    %324 = vmatprep.mubr.f32.mxu0 0.0
    %325 = vmatmul.mubr.f32.gmra.mrb[0].mxu0 %v223
    %v326 = vpop.f32.mrb[0].mxu0
    %v327 = vadd.f32 0.0, %v326
    %v328 = vpop.f32.mrb[0].mxu0
    %329 = vdwg.mxu0
    %v330 = vld [vmem:[%s4] sm:$0x1]
    %v331 = vld [vmem:[#allocation2] sm:$0xff]
    %v332 = vld [vmem:[#allocation2 + $0x8] sm:$0xff]
    %v334 = vlaneseq
    %v335 = vshrl.u32 %v334, 7
    %v336 = vsub.s32 0, %v335
    %v337 = vrot.slane %v330, %v336
    %vm339 = vcmask 130048
    %v341 = vsel %vm339, %v331, 0
    %v344 = vsel %vm339, %v332, 0
    %346 = vmatprep.subr.mxu0 0.0
    %347 = vmatpush1.msra.mxu0 %v292
    %348 = vmatprep.subr.mxu0 0.0
    %349 = vmatpush1.msra.mxu0 %v297
    %350 = vmatprep.subr.mxu0 0.0
    %351 = vmatpush1.msra.mxu0 0.0
    %352 = vmatprep.subr.mxu0 0.0
    %353 = vmatpush1.msra.mxu0 0.0
    %354 = vmatprep.subr.mxu0 0.0
    %355 = vmatpush1.msra.mxu0 0.0
    %356 = vmatprep.subr.mxu0 0.0
    %357 = vmatpush1.msra.mxu0 0.0
    %358 = vmatprep.subr.mxu0 0.0
    %359 = vmatpush1.msra.mxu0 0.0
    %360 = vmatprep.subr.mxu0 0.0
    %361 = vmatpush1.msra.mxu0 0.0
    %362 = vmatprep.subr.mxu0 0.0
    %363 = vmatpush1.msra.mxu0 0.0
    %364 = vmatprep.subr.mxu0 0.0
    %365 = vmatpush1.msra.mxu0 0.0
    %366 = vmatprep.subr.mxu0 0.0
    %367 = vmatpush1.msra.mxu0 0.0
    %368 = vmatprep.subr.mxu0 0.0
    %369 = vmatpush1.msra.mxu0 0.0
    %370 = vmatprep.subr.mxu0 0.0
    %371 = vmatpush1.msra.mxu0 0.0
    %372 = vmatprep.subr.mxu0 0.0
    %373 = vmatpush1.msra.mxu0 0.0
    %374 = vmatprep.subr.mxu0 0.0
    %375 = vmatpush1.msra.mxu0 0.0
    %376 = vmatprep.subr.mxu0 0.0
    %377 = vmatpush1.msra.mxu0 0.0
    %378 = vmatprep.subr.mxu0 0.0
    %379 = vmatpush1.msra.mxu0 0.0
    %380 = vmatprep.subr.mxu0 0.0
    %381 = vmatpush1.msra.mxu0 0.0
    %382 = vmatprep.subr.mxu0 0.0
    %383 = vmatpush1.msra.mxu0 0.0
    %384 = vmatprep.subr.mxu0 0.0
    %385 = vmatpush1.msra.mxu0 0.0
    %386 = vmatprep.subr.mxu0 0.0
    %387 = vmatpush1.msra.mxu0 0.0
    %388 = vmatprep.subr.mxu0 0.0
    %389 = vmatpush1.msra.mxu0 0.0
    %390 = vmatprep.subr.mxu0 0.0
    %391 = vmatpush1.msra.mxu0 0.0
    %392 = vmatprep.subr.mxu0 0.0
    %393 = vmatpush1.msra.mxu0 0.0
    %394 = vmatprep.subr.mxu0 0.0
    %395 = vmatpush1.msra.mxu0 0.0
    %396 = vmatprep.subr.mxu0 0.0
    %397 = vmatpush1.msra.mxu0 0.0
    %398 = vmatprep.subr.mxu0 0.0
    %399 = vmatpush1.msra.mxu0 0.0
    %400 = vmatprep.subr.mxu0 0.0
    %401 = vmatpush1.msra.mxu0 0.0
    %402 = vmatprep.subr.mxu0 0.0
    %403 = vmatpush1.msra.mxu0 0.0
    %404 = vmatprep.subr.mxu0 0.0
    %405 = vmatpush1.msra.mxu0 0.0
    %406 = vmatprep.subr.mxu0 0.0
    %407 = vmatpush1.msra.mxu0 0.0
    %408 = vmatprep.subr.mxu0 0.0
    %409 = vmatpush1.msra.mxu0 0.0
    %410 = vmatprep.mubr.f32.mxu0 0.0
    %411 = vmatmul.mubr.f32.gmra.mrb[0].mxu0 %v341
    %v412 = vpop.f32.mrb[0].mxu0
    %v413 = vadd.f32 %v337, %v412
    %v414 = vpop.f32.mrb[0].mxu0
    %415 = vmatprep.mubr.f32.mxu0 0.0
    %416 = vmatmul.mubr.f32.gmra.mrb[0].mxu0 %v344
    %v417 = vpop.f32.mrb[0].mxu0
    %v418 = vadd.f32 %v337, %v417
    %v419 = vpop.f32.mrb[0].mxu0
    %420 = vdwg.mxu0
    %v421 = vadd.f32 %v413, %v185
    %v422 = vadd.f32 %v418, %v186
    %s423 = scalar_lea.vmem [#allocation2], 16
    %v424 = vld [vmem:[%s423] sm:$0xff]
    %v425 = vld [vmem:[%s423 + $0x8] sm:$0xff]
    %v427 = vsel %vm339, %v424, 0
    %v430 = vsel %vm339, %v425, 0
    %432 = vmatprep.subr.mxu0 0.0
    %433 = vmatpush1.msra.mxu0 %v302
    %434 = vmatprep.subr.mxu0 0.0
    %435 = vmatpush1.msra.mxu0 %v307
    %436 = vmatprep.subr.mxu0 0.0
    %437 = vmatpush1.msra.mxu0 0.0
    %438 = vmatprep.subr.mxu0 0.0
    %439 = vmatpush1.msra.mxu0 0.0
    %440 = vmatprep.subr.mxu0 0.0
    %441 = vmatpush1.msra.mxu0 0.0
    %442 = vmatprep.subr.mxu0 0.0
    %443 = vmatpush1.msra.mxu0 0.0
    %444 = vmatprep.subr.mxu0 0.0
    %445 = vmatpush1.msra.mxu0 0.0
    %446 = vmatprep.subr.mxu0 0.0
    %447 = vmatpush1.msra.mxu0 0.0
    %448 = vmatprep.subr.mxu0 0.0
    %449 = vmatpush1.msra.mxu0 0.0
    %450 = vmatprep.subr.mxu0 0.0
    %451 = vmatpush1.msra.mxu0 0.0
    %452 = vmatprep.subr.mxu0 0.0
    %453 = vmatpush1.msra.mxu0 0.0
    %454 = vmatprep.subr.mxu0 0.0
    %455 = vmatpush1.msra.mxu0 0.0
    %456 = vmatprep.subr.mxu0 0.0
    %457 = vmatpush1.msra.mxu0 0.0
    %458 = vmatprep.subr.mxu0 0.0
    %459 = vmatpush1.msra.mxu0 0.0
    %460 = vmatprep.subr.mxu0 0.0
    %461 = vmatpush1.msra.mxu0 0.0
    %462 = vmatprep.subr.mxu0 0.0
    %463 = vmatpush1.msra.mxu0 0.0
    %464 = vmatprep.subr.mxu0 0.0
    %465 = vmatpush1.msra.mxu0 0.0
    %466 = vmatprep.subr.mxu0 0.0
    %467 = vmatpush1.msra.mxu0 0.0
    %468 = vmatprep.subr.mxu0 0.0
    %469 = vmatpush1.msra.mxu0 0.0
    %470 = vmatprep.subr.mxu0 0.0
    %471 = vmatpush1.msra.mxu0 0.0
    %472 = vmatprep.subr.mxu0 0.0
    %473 = vmatpush1.msra.mxu0 0.0
    %474 = vmatprep.subr.mxu0 0.0
    %475 = vmatpush1.msra.mxu0 0.0
    %476 = vmatprep.subr.mxu0 0.0
    %477 = vmatpush1.msra.mxu0 0.0
    %478 = vmatprep.subr.mxu0 0.0
    %479 = vmatpush1.msra.mxu0 0.0
    %480 = vmatprep.subr.mxu0 0.0
    %481 = vmatpush1.msra.mxu0 0.0
    %482 = vmatprep.subr.mxu0 0.0
    %483 = vmatpush1.msra.mxu0 0.0
    %484 = vmatprep.subr.mxu0 0.0
    %485 = vmatpush1.msra.mxu0 0.0
    %486 = vmatprep.subr.mxu0 0.0
    %487 = vmatpush1.msra.mxu0 0.0
    %488 = vmatprep.subr.mxu0 0.0
    %489 = vmatpush1.msra.mxu0 0.0
    %490 = vmatprep.subr.mxu0 0.0
    %491 = vmatpush1.msra.mxu0 0.0
    %492 = vmatprep.subr.mxu0 0.0
    %493 = vmatpush1.msra.mxu0 0.0
    %494 = vmatprep.subr.mxu0 0.0
    %495 = vmatpush1.msra.mxu0 0.0
    %496 = vmatprep.mubr.f32.mxu0 0.0
    %497 = vmatmul.mubr.f32.gmra.mrb[0].mxu0 %v427
    %v498 = vpop.f32.mrb[0].mxu0
    %v499 = vadd.f32 %v337, %v498
    %v500 = vpop.f32.mrb[0].mxu0
    %501 = vmatprep.mubr.f32.mxu0 0.0
    %502 = vmatmul.mubr.f32.gmra.mrb[0].mxu0 %v430
    %v503 = vpop.f32.mrb[0].mxu0
    %v504 = vadd.f32 %v337, %v503
    %v505 = vpop.f32.mrb[0].mxu0
    %506 = vdwg.mxu0
    %v507 = vadd.f32 %v499, %v188
    %v508 = vadd.f32 %v504, %v189
    %s509 = scalar_lea.vmem [#allocation2], 32
    %v510 = vld [vmem:[%s509] sm:$0xff]
    %v511 = vld [vmem:[%s509 + $0x8] sm:$0xff]
    %v513 = vsel %vm339, %v510, 0
    %v516 = vsel %vm339, %v511, 0
    %518 = vmatprep.subr.mxu0 0.0
    %519 = vmatpush1.msra.mxu0 %v312
    %520 = vmatprep.subr.mxu0 0.0
    %521 = vmatpush1.msra.mxu0 %v317
    %522 = vmatprep.subr.mxu0 0.0
    %523 = vmatpush1.msra.mxu0 0.0
    %524 = vmatprep.subr.mxu0 0.0
    %525 = vmatpush1.msra.mxu0 0.0
    %526 = vmatprep.subr.mxu0 0.0
    %527 = vmatpush1.msra.mxu0 0.0
    %528 = vmatprep.subr.mxu0 0.0
    %529 = vmatpush1.msra.mxu0 0.0
    %530 = vmatprep.subr.mxu0 0.0
    %531 = vmatpush1.msra.mxu0 0.0
    %532 = vmatprep.subr.mxu0 0.0
    %533 = vmatpush1.msra.mxu0 0.0
    %534 = vmatprep.subr.mxu0 0.0
    %535 = vmatpush1.msra.mxu0 0.0
    %536 = vmatprep.subr.mxu0 0.0
    %537 = vmatpush1.msra.mxu0 0.0
    %538 = vmatprep.subr.mxu0 0.0
    %539 = vmatpush1.msra.mxu0 0.0
    %540 = vmatprep.subr.mxu0 0.0
    %541 = vmatpush1.msra.mxu0 0.0
    %542 = vmatprep.subr.mxu0 0.0
    %543 = vmatpush1.msra.mxu0 0.0
    %544 = vmatprep.subr.mxu0 0.0
    %545 = vmatpush1.msra.mxu0 0.0
    %546 = vmatprep.subr.mxu0 0.0
    %547 = vmatpush1.msra.mxu0 0.0
    %548 = vmatprep.subr.mxu0 0.0
    %549 = vmatpush1.msra.mxu0 0.0
    %550 = vmatprep.subr.mxu0 0.0
    %551 = vmatpush1.msra.mxu0 0.0
    %552 = vmatprep.subr.mxu0 0.0
    %553 = vmatpush1.msra.mxu0 0.0
    %554 = vmatprep.subr.mxu0 0.0
    %555 = vmatpush1.msra.mxu0 0.0
    %556 = vmatprep.subr.mxu0 0.0
    %557 = vmatpush1.msra.mxu0 0.0
    %558 = vmatprep.subr.mxu0 0.0
    %559 = vmatpush1.msra.mxu0 0.0
    %560 = vmatprep.subr.mxu0 0.0
    %561 = vmatpush1.msra.mxu0 0.0
    %562 = vmatprep.subr.mxu0 0.0
    %563 = vmatpush1.msra.mxu0 0.0
    %564 = vmatprep.subr.mxu0 0.0
    %565 = vmatpush1.msra.mxu0 0.0
    %566 = vmatprep.subr.mxu0 0.0
    %567 = vmatpush1.msra.mxu0 0.0
    %568 = vmatprep.subr.mxu0 0.0
    %569 = vmatpush1.msra.mxu0 0.0
    %570 = vmatprep.subr.mxu0 0.0
    %571 = vmatpush1.msra.mxu0 0.0
    %572 = vmatprep.subr.mxu0 0.0
    %573 = vmatpush1.msra.mxu0 0.0
    %574 = vmatprep.subr.mxu0 0.0
    %575 = vmatpush1.msra.mxu0 0.0
    %576 = vmatprep.subr.mxu0 0.0
    %577 = vmatpush1.msra.mxu0 0.0
    %578 = vmatprep.subr.mxu0 0.0
    %579 = vmatpush1.msra.mxu0 0.0
    %580 = vmatprep.subr.mxu0 0.0
    %581 = vmatpush1.msra.mxu0 0.0
    %582 = vmatprep.mubr.f32.mxu0 0.0
    %583 = vmatmul.mubr.f32.gmra.mrb[0].mxu0 %v513
    %v584 = vpop.f32.mrb[0].mxu0
    %v585 = vadd.f32 %v337, %v584
    %v586 = vpop.f32.mrb[0].mxu0
    %587 = vmatprep.mubr.f32.mxu0 0.0
    %588 = vmatmul.mubr.f32.gmra.mrb[0].mxu0 %v516
    %v589 = vpop.f32.mrb[0].mxu0
    %v590 = vadd.f32 %v337, %v589
    %v591 = vpop.f32.mrb[0].mxu0
    %592 = vdwg.mxu0
    %v593 = vadd.f32 %v585, %v191
    %v594 = vadd.f32 %v590, %v192
    %s595 = scalar_lea.vmem [#allocation2], 48
    %v596 = vld [vmem:[%s595] sm:$0xff]
    %v597 = vld [vmem:[%s595 + $0x8] sm:$0xff]
    %v599 = vsel %vm339, %v596, 0
    %v602 = vsel %vm339, %v597, 0
    %604 = vmatprep.subr.mxu0 0.0
    %605 = vmatpush1.msra.mxu0 %v322
    %606 = vmatprep.subr.mxu0 0.0
    %607 = vmatpush1.msra.mxu0 %v327
    %608 = vmatprep.subr.mxu0 0.0
    %609 = vmatpush1.msra.mxu0 0.0
    %610 = vmatprep.subr.mxu0 0.0
    %611 = vmatpush1.msra.mxu0 0.0
    %612 = vmatprep.subr.mxu0 0.0
    %613 = vmatpush1.msra.mxu0 0.0
    %614 = vmatprep.subr.mxu0 0.0
    %615 = vmatpush1.msra.mxu0 0.0
    %616 = vmatprep.subr.mxu0 0.0
    %617 = vmatpush1.msra.mxu0 0.0
    %618 = vmatprep.subr.mxu0 0.0
    %619 = vmatpush1.msra.mxu0 0.0
    %620 = vmatprep.subr.mxu0 0.0
    %621 = vmatpush1.msra.mxu0 0.0
    %622 = vmatprep.subr.mxu0 0.0
    %623 = vmatpush1.msra.mxu0 0.0
    %624 = vmatprep.subr.mxu0 0.0
    %625 = vmatpush1.msra.mxu0 0.0
    %626 = vmatprep.subr.mxu0 0.0
    %627 = vmatpush1.msra.mxu0 0.0
    %628 = vmatprep.subr.mxu0 0.0
    %629 = vmatpush1.msra.mxu0 0.0
    %630 = vmatprep.subr.mxu0 0.0
    %631 = vmatpush1.msra.mxu0 0.0
    %632 = vmatprep.subr.mxu0 0.0
    %633 = vmatpush1.msra.mxu0 0.0
    %634 = vmatprep.subr.mxu0 0.0
    %635 = vmatpush1.msra.mxu0 0.0
    %636 = vmatprep.subr.mxu0 0.0
    %637 = vmatpush1.msra.mxu0 0.0
    %638 = vmatprep.subr.mxu0 0.0
    %639 = vmatpush1.msra.mxu0 0.0
    %640 = vmatprep.subr.mxu0 0.0
    %641 = vmatpush1.msra.mxu0 0.0
    %642 = vmatprep.subr.mxu0 0.0
    %643 = vmatpush1.msra.mxu0 0.0
    %644 = vmatprep.subr.mxu0 0.0
    %645 = vmatpush1.msra.mxu0 0.0
    %646 = vmatprep.subr.mxu0 0.0
    %647 = vmatpush1.msra.mxu0 0.0
    %648 = vmatprep.subr.mxu0 0.0
    %649 = vmatpush1.msra.mxu0 0.0
    %650 = vmatprep.subr.mxu0 0.0
    %651 = vmatpush1.msra.mxu0 0.0
    %652 = vmatprep.subr.mxu0 0.0
    %653 = vmatpush1.msra.mxu0 0.0
    %654 = vmatprep.subr.mxu0 0.0
    %655 = vmatpush1.msra.mxu0 0.0
    %656 = vmatprep.subr.mxu0 0.0
    %657 = vmatpush1.msra.mxu0 0.0
    %658 = vmatprep.subr.mxu0 0.0
    %659 = vmatpush1.msra.mxu0 0.0
    %660 = vmatprep.subr.mxu0 0.0
    %661 = vmatpush1.msra.mxu0 0.0
    %662 = vmatprep.subr.mxu0 0.0
    %663 = vmatpush1.msra.mxu0 0.0
    %664 = vmatprep.subr.mxu0 0.0
    %665 = vmatpush1.msra.mxu0 0.0
    %666 = vmatprep.subr.mxu0 0.0
    %667 = vmatpush1.msra.mxu0 0.0
    %668 = vmatprep.mubr.f32.mxu0 0.0
    %669 = vmatmul.mubr.f32.gmra.mrb[0].mxu0 %v599
    %v670 = vpop.f32.mrb[0].mxu0
    %v671 = vadd.f32 %v337, %v670
    %v672 = vpop.f32.mrb[0].mxu0
    %673 = vmatprep.mubr.f32.mxu0 0.0
    %674 = vmatmul.mubr.f32.gmra.mrb[0].mxu0 %v602
    %v675 = vpop.f32.mrb[0].mxu0
    %v676 = vadd.f32 %v337, %v675
    %v677 = vpop.f32.mrb[0].mxu0
    %678 = vdwg.mxu0
    %v679 = vadd.f32 %v671, %v194
    %v680 = vadd.f32 %v676, %v195
    %v681 = vld [vmem:[#allocation8] sm:$0x1]
    %v682 = vlaneseq
    %v683 = vshrl.u32 %v682, 7
    %v684 = vsub.s32 0, %v683
    %v685 = vrot.slane %v681, %v684
    %v686 = vadd.f32 %v421, %v685
    %v687 = vadd.f32 %v422, %v685
    %v688 = vld [vmem:[#allocation8 + $0x1] sm:$0x1]
    %v689 = vlaneseq
    %v690 = vshrl.u32 %v689, 7
    %v691 = vsub.s32 0, %v690
    %v692 = vrot.slane %v688, %v691
    %v693 = vadd.f32 %v507, %v692
    %v694 = vadd.f32 %v508, %v692
    %v695 = vld [vmem:[#allocation8 + $0x2] sm:$0x1]
    %v696 = vlaneseq
    %v697 = vshrl.u32 %v696, 7
    %v698 = vsub.s32 0, %v697
    %v699 = vrot.slane %v695, %v698
    %v700 = vadd.f32 %v593, %v699
    %v701 = vadd.f32 %v594, %v699
    %v702 = vld [vmem:[#allocation8 + $0x3] sm:$0x1]
    %v703 = vlaneseq
    %v704 = vshrl.u32 %v703, 7
    %v705 = vsub.s32 0, %v704
    %v706 = vrot.slane %v702, %v705
    %v707 = vadd.f32 %v679, %v706
    %v708 = vadd.f32 %v680, %v706
    %v709 = vld [vmem:[#allocation15] sm:$0x1]
    %v710 = vlaneseq
    %v711 = vshrl.u32 %v710, 7
    %v712 = vsub.s32 0, %v711
    %v713 = vrot.slane %v709, %v712
    %v714 = vadd.f32 %v421, %v713
    %v715 = vadd.f32 %v422, %v713
    %v716 = vld [vmem:[#allocation15 + $0x1] sm:$0x1]
    %v717 = vlaneseq
    %v718 = vshrl.u32 %v717, 7
    %v719 = vsub.s32 0, %v718
    %v720 = vrot.slane %v716, %v719
    %v721 = vadd.f32 %v507, %v720
    %v722 = vadd.f32 %v508, %v720
    %v723 = vld [vmem:[#allocation15 + $0x2] sm:$0x1]
    %v724 = vlaneseq
    %v725 = vshrl.u32 %v724, 7
    %v726 = vsub.s32 0, %v725
    %v727 = vrot.slane %v723, %v726
    %v728 = vadd.f32 %v593, %v727
    %v729 = vadd.f32 %v594, %v727
    %v730 = vld [vmem:[#allocation15 + $0x3] sm:$0x1]
    %v731 = vlaneseq
    %v732 = vshrl.u32 %v731, 7
    %v733 = vsub.s32 0, %v732
    %v734 = vrot.slane %v730, %v733
    %v735 = vadd.f32 %v679, %v734
    %v736 = vadd.f32 %v680, %v734
    %v737 = vld [vmem:[%s6] sm:$0xff]
    %v738 = vld [vmem:[%s6 + $0x8] sm:$0xff]
    %v739 = vld [vmem:[%s6 + $0x10] sm:$0xff]
    %v740 = vld [vmem:[%s6 + $0x18] sm:$0xff]
    %v742 = vsel %vm200, %v686, 0
    %v745 = vsel %vm200, %v687, 0
    %v748 = vsel %vm200, %v693, 0
    %v751 = vsel %vm200, %v694, 0
    %v754 = vsel %vm200, %v700, 0
    %v757 = vsel %vm200, %v701, 0
    %v760 = vsel %vm200, %v707, 0
    %v763 = vsel %vm200, %v708, 0
    %765 = vmatprep.subr.mxu0 0.0
    %766 = vmatpush1.msra.mxu0 %v737
    %767 = vmatprep.subr.mxu0 0.0
    %768 = vmatpush1.msra.mxu0 %v738
    %769 = vmatprep.subr.mxu0 0.0
    %770 = vmatpush1.msra.mxu0 %v739
    %771 = vmatprep.subr.mxu0 0.0
    %772 = vmatpush1.msra.mxu0 %v740
    %773 = vmatprep.subr.mxu0 0.0
    %774 = vmatpush1.msra.mxu0 0.0
    %775 = vmatprep.subr.mxu0 0.0
    %776 = vmatpush1.msra.mxu0 0.0
    %777 = vmatprep.subr.mxu0 0.0
    %778 = vmatpush1.msra.mxu0 0.0
    %779 = vmatprep.subr.mxu0 0.0
    %780 = vmatpush1.msra.mxu0 0.0
    %781 = vmatprep.subr.mxu0 0.0
    %782 = vmatpush1.msra.mxu0 0.0
    %783 = vmatprep.subr.mxu0 0.0
    %784 = vmatpush1.msra.mxu0 0.0
    %785 = vmatprep.subr.mxu0 0.0
    %786 = vmatpush1.msra.mxu0 0.0
    %787 = vmatprep.subr.mxu0 0.0
    %788 = vmatpush1.msra.mxu0 0.0
    %789 = vmatprep.subr.mxu0 0.0
    %790 = vmatpush1.msra.mxu0 0.0
    %791 = vmatprep.subr.mxu0 0.0
    %792 = vmatpush1.msra.mxu0 0.0
    %793 = vmatprep.subr.mxu0 0.0
    %794 = vmatpush1.msra.mxu0 0.0
    %795 = vmatprep.subr.mxu0 0.0
    %796 = vmatpush1.msra.mxu0 0.0
    %797 = vmatprep.subr.mxu0 0.0
    %798 = vmatpush1.msra.mxu0 0.0
    %799 = vmatprep.subr.mxu0 0.0
    %800 = vmatpush1.msra.mxu0 0.0
    %801 = vmatprep.subr.mxu0 0.0
    %802 = vmatpush1.msra.mxu0 0.0
    %803 = vmatprep.subr.mxu0 0.0
    %804 = vmatpush1.msra.mxu0 0.0
    %805 = vmatprep.subr.mxu0 0.0
    %806 = vmatpush1.msra.mxu0 0.0
    %807 = vmatprep.subr.mxu0 0.0
    %808 = vmatpush1.msra.mxu0 0.0
    %809 = vmatprep.subr.mxu0 0.0
    %810 = vmatpush1.msra.mxu0 0.0
    %811 = vmatprep.subr.mxu0 0.0
    %812 = vmatpush1.msra.mxu0 0.0
    %813 = vmatprep.subr.mxu0 0.0
    %814 = vmatpush1.msra.mxu0 0.0
    %815 = vmatprep.subr.mxu0 0.0
    %816 = vmatpush1.msra.mxu0 0.0
    %817 = vmatprep.subr.mxu0 0.0
    %818 = vmatpush1.msra.mxu0 0.0
    %819 = vmatprep.subr.mxu0 0.0
    %820 = vmatpush1.msra.mxu0 0.0
    %821 = vmatprep.subr.mxu0 0.0
    %822 = vmatpush1.msra.mxu0 0.0
    %823 = vmatprep.subr.mxu0 0.0
    %824 = vmatpush1.msra.mxu0 0.0
    %825 = vmatprep.subr.mxu0 0.0
    %826 = vmatpush1.msra.mxu0 0.0
    %827 = vmatprep.subr.mxu0 0.0
    %828 = vmatpush1.msra.mxu0 0.0
    %829 = vmatprep.mubr.f32.mxu0 0.0
    %830 = vmatmul.mubr.f32.gmra.mrb[0].mxu0 %v742
    %v831 = vpop.f32.mrb[0].mxu0
    %v832 = vadd.f32 0.0, %v831
    %v833 = vpop.f32.mrb[0].mxu0
    %834 = vmatprep.mubr.f32.mxu0 0.0
    %835 = vmatmul.mubr.f32.gmra.mrb[0].mxu0 %v745
    %v836 = vpop.f32.mrb[0].mxu0
    %v837 = vadd.f32 0.0, %v836
    %v838 = vpop.f32.mrb[0].mxu0
    %839 = vmatprep.mubr.f32.mxu0 0.0
    %840 = vmatmul.mubr.f32.gmra.mrb[0].mxu0 %v748
    %v841 = vpop.f32.mrb[0].mxu0
    %v842 = vadd.f32 0.0, %v841
    %v843 = vpop.f32.mrb[0].mxu0
    %844 = vmatprep.mubr.f32.mxu0 0.0
    %845 = vmatmul.mubr.f32.gmra.mrb[0].mxu0 %v751
    %v846 = vpop.f32.mrb[0].mxu0
    %v847 = vadd.f32 0.0, %v846
    %v848 = vpop.f32.mrb[0].mxu0
    %849 = vmatprep.mubr.f32.mxu0 0.0
    %850 = vmatmul.mubr.f32.gmra.mrb[0].mxu0 %v754
    %v851 = vpop.f32.mrb[0].mxu0
    %v852 = vadd.f32 0.0, %v851
    %v853 = vpop.f32.mrb[0].mxu0
    %854 = vmatprep.mubr.f32.mxu0 0.0
    %855 = vmatmul.mubr.f32.gmra.mrb[0].mxu0 %v757
    %v856 = vpop.f32.mrb[0].mxu0
    %v857 = vadd.f32 0.0, %v856
    %v858 = vpop.f32.mrb[0].mxu0
    %859 = vmatprep.mubr.f32.mxu0 0.0
    %860 = vmatmul.mubr.f32.gmra.mrb[0].mxu0 %v760
    %v861 = vpop.f32.mrb[0].mxu0
    %v862 = vadd.f32 0.0, %v861
    %v863 = vpop.f32.mrb[0].mxu0
    %864 = vmatprep.mubr.f32.mxu0 0.0
    %865 = vmatmul.mubr.f32.gmra.mrb[0].mxu0 %v763
    %v866 = vpop.f32.mrb[0].mxu0
    %v867 = vadd.f32 0.0, %v866
    %v868 = vpop.f32.mrb[0].mxu0
    %869 = vdwg.mxu0
    %v870 = vld [vmem:[#allocation9] sm:$0xff]
    %v871 = vld [vmem:[#allocation9 + $0x8] sm:$0xff]
    %v872 = vld [vmem:[#allocation9 + $0x10] sm:$0xff]
    %v873 = vld [vmem:[#allocation9 + $0x18] sm:$0xff]
    %874 = vmatprep.subr.mxu0 0.0
    %875 = vmatpush1.msra.mxu0 %v870
    %876 = vmatprep.subr.mxu0 0.0
    %877 = vmatpush1.msra.mxu0 %v871
    %878 = vmatprep.subr.mxu0 0.0
    %879 = vmatpush1.msra.mxu0 %v872
    %880 = vmatprep.subr.mxu0 0.0
    %881 = vmatpush1.msra.mxu0 %v873
    %882 = vmatprep.subr.mxu0 0.0
    %883 = vmatpush1.msra.mxu0 0.0
    %884 = vmatprep.subr.mxu0 0.0
    %885 = vmatpush1.msra.mxu0 0.0
    %886 = vmatprep.subr.mxu0 0.0
    %887 = vmatpush1.msra.mxu0 0.0
    %888 = vmatprep.subr.mxu0 0.0
    %889 = vmatpush1.msra.mxu0 0.0
    %890 = vmatprep.subr.mxu0 0.0
    %891 = vmatpush1.msra.mxu0 0.0
    %892 = vmatprep.subr.mxu0 0.0
    %893 = vmatpush1.msra.mxu0 0.0
    %894 = vmatprep.subr.mxu0 0.0
    %895 = vmatpush1.msra.mxu0 0.0
    %896 = vmatprep.subr.mxu0 0.0
    %897 = vmatpush1.msra.mxu0 0.0
    %898 = vmatprep.subr.mxu0 0.0
    %899 = vmatpush1.msra.mxu0 0.0
    %900 = vmatprep.subr.mxu0 0.0
    %901 = vmatpush1.msra.mxu0 0.0
    %902 = vmatprep.subr.mxu0 0.0
    %903 = vmatpush1.msra.mxu0 0.0
    %904 = vmatprep.subr.mxu0 0.0
    %905 = vmatpush1.msra.mxu0 0.0
    %906 = vmatprep.subr.mxu0 0.0
    %907 = vmatpush1.msra.mxu0 0.0
    %908 = vmatprep.subr.mxu0 0.0
    %909 = vmatpush1.msra.mxu0 0.0
    %910 = vmatprep.subr.mxu0 0.0
    %911 = vmatpush1.msra.mxu0 0.0
    %912 = vmatprep.subr.mxu0 0.0
    %913 = vmatpush1.msra.mxu0 0.0
    %914 = vmatprep.subr.mxu0 0.0
    %915 = vmatpush1.msra.mxu0 0.0
    %916 = vmatprep.subr.mxu0 0.0
    %917 = vmatpush1.msra.mxu0 0.0
    %918 = vmatprep.subr.mxu0 0.0
    %919 = vmatpush1.msra.mxu0 0.0
    %920 = vmatprep.subr.mxu0 0.0
    %921 = vmatpush1.msra.mxu0 0.0
    %922 = vmatprep.subr.mxu0 0.0
    %923 = vmatpush1.msra.mxu0 0.0
    %924 = vmatprep.subr.mxu0 0.0
    %925 = vmatpush1.msra.mxu0 0.0
    %926 = vmatprep.subr.mxu0 0.0
    %927 = vmatpush1.msra.mxu0 0.0
    %928 = vmatprep.subr.mxu0 0.0
    %929 = vmatpush1.msra.mxu0 0.0
    %930 = vmatprep.subr.mxu0 0.0
    %931 = vmatpush1.msra.mxu0 0.0
    %932 = vmatprep.subr.mxu0 0.0
    %933 = vmatpush1.msra.mxu0 0.0
    %934 = vmatprep.subr.mxu0 0.0
    %935 = vmatpush1.msra.mxu0 0.0
    %936 = vmatprep.subr.mxu0 0.0
    %937 = vmatpush1.msra.mxu0 0.0
    %938 = vmatprep.mubr.f32.mxu0 0.0
    %939 = vmatmul.mubr.f32.gmra.mrb[0].mxu0 %v742
    %v940 = vpop.f32.mrb[0].mxu0
    %v941 = vadd.f32 0.0, %v940
    %v942 = vpop.f32.mrb[0].mxu0
    %943 = vmatprep.mubr.f32.mxu0 0.0
    %944 = vmatmul.mubr.f32.gmra.mrb[0].mxu0 %v745
    %v945 = vpop.f32.mrb[0].mxu0
    %v946 = vadd.f32 0.0, %v945
    %v947 = vpop.f32.mrb[0].mxu0
    %948 = vmatprep.mubr.f32.mxu0 0.0
    %949 = vmatmul.mubr.f32.gmra.mrb[0].mxu0 %v748
    %v950 = vpop.f32.mrb[0].mxu0
    %v951 = vadd.f32 0.0, %v950
    %v952 = vpop.f32.mrb[0].mxu0
    %953 = vmatprep.mubr.f32.mxu0 0.0
    %954 = vmatmul.mubr.f32.gmra.mrb[0].mxu0 %v751
    %v955 = vpop.f32.mrb[0].mxu0
    %v956 = vadd.f32 0.0, %v955
    %v957 = vpop.f32.mrb[0].mxu0
    %958 = vmatprep.mubr.f32.mxu0 0.0
    %959 = vmatmul.mubr.f32.gmra.mrb[0].mxu0 %v754
    %v960 = vpop.f32.mrb[0].mxu0
    %v961 = vadd.f32 0.0, %v960
    %v962 = vpop.f32.mrb[0].mxu0
    %963 = vmatprep.mubr.f32.mxu0 0.0
    %964 = vmatmul.mubr.f32.gmra.mrb[0].mxu0 %v757
    %v965 = vpop.f32.mrb[0].mxu0
    %v966 = vadd.f32 0.0, %v965
    %v967 = vpop.f32.mrb[0].mxu0
    %968 = vmatprep.mubr.f32.mxu0 0.0
    %969 = vmatmul.mubr.f32.gmra.mrb[0].mxu0 %v760
    %v970 = vpop.f32.mrb[0].mxu0
    %v971 = vadd.f32 0.0, %v970
    %v972 = vpop.f32.mrb[0].mxu0
    %973 = vmatprep.mubr.f32.mxu0 0.0
    %974 = vmatmul.mubr.f32.gmra.mrb[0].mxu0 %v763
    %v975 = vpop.f32.mrb[0].mxu0
    %v976 = vadd.f32 0.0, %v975
    %v977 = vpop.f32.mrb[0].mxu0
    %978 = vdwg.mxu0
    %v979 = vld [vmem:[#allocation11] sm:$0xff]
    %v980 = vld [vmem:[#allocation11 + $0x8] sm:$0xff]
    %v981 = vld [vmem:[#allocation11 + $0x10] sm:$0xff]
    %v982 = vld [vmem:[#allocation11 + $0x18] sm:$0xff]
    %983 = vmatprep.subr.mxu0 0.0
    %984 = vmatpush1.msra.mxu0 %v979
    %985 = vmatprep.subr.mxu0 0.0
    %986 = vmatpush1.msra.mxu0 %v980
    %987 = vmatprep.subr.mxu0 0.0
    %988 = vmatpush1.msra.mxu0 %v981
    %989 = vmatprep.subr.mxu0 0.0
    %990 = vmatpush1.msra.mxu0 %v982
    %991 = vmatprep.subr.mxu0 0.0
    %992 = vmatpush1.msra.mxu0 0.0
    %993 = vmatprep.subr.mxu0 0.0
    %994 = vmatpush1.msra.mxu0 0.0
    %995 = vmatprep.subr.mxu0 0.0
    %996 = vmatpush1.msra.mxu0 0.0
    %997 = vmatprep.subr.mxu0 0.0
    %998 = vmatpush1.msra.mxu0 0.0
    %999 = vmatprep.subr.mxu0 0.0
    %1000 = vmatpush1.msra.mxu0 0.0
    %1001 = vmatprep.subr.mxu0 0.0
    %1002 = vmatpush1.msra.mxu0 0.0
    %1003 = vmatprep.subr.mxu0 0.0
    %1004 = vmatpush1.msra.mxu0 0.0
    %1005 = vmatprep.subr.mxu0 0.0
    %1006 = vmatpush1.msra.mxu0 0.0
    %1007 = vmatprep.subr.mxu0 0.0
    %1008 = vmatpush1.msra.mxu0 0.0
    %1009 = vmatprep.subr.mxu0 0.0
    %1010 = vmatpush1.msra.mxu0 0.0
    %1011 = vmatprep.subr.mxu0 0.0
    %1012 = vmatpush1.msra.mxu0 0.0
    %1013 = vmatprep.subr.mxu0 0.0
    %1014 = vmatpush1.msra.mxu0 0.0
    %1015 = vmatprep.subr.mxu0 0.0
    %1016 = vmatpush1.msra.mxu0 0.0
    %1017 = vmatprep.subr.mxu0 0.0
    %1018 = vmatpush1.msra.mxu0 0.0
    %1019 = vmatprep.subr.mxu0 0.0
    %1020 = vmatpush1.msra.mxu0 0.0
    %1021 = vmatprep.subr.mxu0 0.0
    %1022 = vmatpush1.msra.mxu0 0.0
    %1023 = vmatprep.subr.mxu0 0.0
    %1024 = vmatpush1.msra.mxu0 0.0
    %1025 = vmatprep.subr.mxu0 0.0
    %1026 = vmatpush1.msra.mxu0 0.0
    %1027 = vmatprep.subr.mxu0 0.0
    %1028 = vmatpush1.msra.mxu0 0.0
    %1029 = vmatprep.subr.mxu0 0.0
    %1030 = vmatpush1.msra.mxu0 0.0
    %1031 = vmatprep.subr.mxu0 0.0
    %1032 = vmatpush1.msra.mxu0 0.0
    %1033 = vmatprep.subr.mxu0 0.0
    %1034 = vmatpush1.msra.mxu0 0.0
    %1035 = vmatprep.subr.mxu0 0.0
    %1036 = vmatpush1.msra.mxu0 0.0
    %1037 = vmatprep.subr.mxu0 0.0
    %1038 = vmatpush1.msra.mxu0 0.0
    %1039 = vmatprep.subr.mxu0 0.0
    %1040 = vmatpush1.msra.mxu0 0.0
    %1041 = vmatprep.subr.mxu0 0.0
    %1042 = vmatpush1.msra.mxu0 0.0
    %1043 = vmatprep.subr.mxu0 0.0
    %1044 = vmatpush1.msra.mxu0 0.0
    %1045 = vmatprep.subr.mxu0 0.0
    %1046 = vmatpush1.msra.mxu0 0.0
    %1047 = vmatprep.mubr.f32.mxu0 0.0
    %1048 = vmatmul.mubr.f32.gmra.mrb[0].mxu0 %v742
    %v1049 = vpop.f32.mrb[0].mxu0
    %v1050 = vadd.f32 0.0, %v1049
    %v1051 = vpop.f32.mrb[0].mxu0
    %1052 = vmatprep.mubr.f32.mxu0 0.0
    %1053 = vmatmul.mubr.f32.gmra.mrb[0].mxu0 %v745
    %v1054 = vpop.f32.mrb[0].mxu0
    %v1055 = vadd.f32 0.0, %v1054
    %v1056 = vpop.f32.mrb[0].mxu0
    %1057 = vmatprep.mubr.f32.mxu0 0.0
    %1058 = vmatmul.mubr.f32.gmra.mrb[0].mxu0 %v748
    %v1059 = vpop.f32.mrb[0].mxu0
    %v1060 = vadd.f32 0.0, %v1059
    %v1061 = vpop.f32.mrb[0].mxu0
    %1062 = vmatprep.mubr.f32.mxu0 0.0
    %1063 = vmatmul.mubr.f32.gmra.mrb[0].mxu0 %v751
    %v1064 = vpop.f32.mrb[0].mxu0
    %v1065 = vadd.f32 0.0, %v1064
    %v1066 = vpop.f32.mrb[0].mxu0
    %1067 = vmatprep.mubr.f32.mxu0 0.0
    %1068 = vmatmul.mubr.f32.gmra.mrb[0].mxu0 %v754
    %v1069 = vpop.f32.mrb[0].mxu0
    %v1070 = vadd.f32 0.0, %v1069
    %v1071 = vpop.f32.mrb[0].mxu0
    %1072 = vmatprep.mubr.f32.mxu0 0.0
    %1073 = vmatmul.mubr.f32.gmra.mrb[0].mxu0 %v757
    %v1074 = vpop.f32.mrb[0].mxu0
    %v1075 = vadd.f32 0.0, %v1074
    %v1076 = vpop.f32.mrb[0].mxu0
    %1077 = vmatprep.mubr.f32.mxu0 0.0
    %1078 = vmatmul.mubr.f32.gmra.mrb[0].mxu0 %v760
    %v1079 = vpop.f32.mrb[0].mxu0
    %v1080 = vadd.f32 0.0, %v1079
    %v1081 = vpop.f32.mrb[0].mxu0
    %1082 = vmatprep.mubr.f32.mxu0 0.0
    %1083 = vmatmul.mubr.f32.gmra.mrb[0].mxu0 %v763
    %v1084 = vpop.f32.mrb[0].mxu0
    %v1085 = vadd.f32 0.0, %v1084
    %v1086 = vpop.f32.mrb[0].mxu0
    %1087 = vdwg.mxu0
    %v1088 = vld [vmem:[#allocation17] sm:$0xff]
    %v1089 = vld [vmem:[#allocation17 + $0x8] sm:$0xff]
    %v1090 = vld [vmem:[#allocation17 + $0x10] sm:$0xff]
    %v1091 = vld [vmem:[#allocation17 + $0x18] sm:$0xff]
    %v1093 = vsel %vm200, %v714, 0
    %v1096 = vsel %vm200, %v715, 0
    %v1099 = vsel %vm200, %v721, 0
    %v1102 = vsel %vm200, %v722, 0
    %v1105 = vsel %vm200, %v728, 0
    %v1108 = vsel %vm200, %v729, 0
    %v1111 = vsel %vm200, %v735, 0
    %v1114 = vsel %vm200, %v736, 0
    %1116 = vmatprep.subr.mxu0 0.0
    %1117 = vmatpush1.msra.mxu0 %v1088
    %1118 = vmatprep.subr.mxu0 0.0
    %1119 = vmatpush1.msra.mxu0 %v1089
    %1120 = vmatprep.subr.mxu0 0.0
    %1121 = vmatpush1.msra.mxu0 %v1090
    %1122 = vmatprep.subr.mxu0 0.0
    %1123 = vmatpush1.msra.mxu0 %v1091
    %1124 = vmatprep.subr.mxu0 0.0
    %1125 = vmatpush1.msra.mxu0 0.0
    %1126 = vmatprep.subr.mxu0 0.0
    %1127 = vmatpush1.msra.mxu0 0.0
    %1128 = vmatprep.subr.mxu0 0.0
    %1129 = vmatpush1.msra.mxu0 0.0
    %1130 = vmatprep.subr.mxu0 0.0
    %1131 = vmatpush1.msra.mxu0 0.0
    %1132 = vmatprep.subr.mxu0 0.0
    %1133 = vmatpush1.msra.mxu0 0.0
    %1134 = vmatprep.subr.mxu0 0.0
    %1135 = vmatpush1.msra.mxu0 0.0
    %1136 = vmatprep.subr.mxu0 0.0
    %1137 = vmatpush1.msra.mxu0 0.0
    %1138 = vmatprep.subr.mxu0 0.0
    %1139 = vmatpush1.msra.mxu0 0.0
    %1140 = vmatprep.subr.mxu0 0.0
    %1141 = vmatpush1.msra.mxu0 0.0
    %1142 = vmatprep.subr.mxu0 0.0
    %1143 = vmatpush1.msra.mxu0 0.0
    %1144 = vmatprep.subr.mxu0 0.0
    %1145 = vmatpush1.msra.mxu0 0.0
    %1146 = vmatprep.subr.mxu0 0.0
    %1147 = vmatpush1.msra.mxu0 0.0
    %1148 = vmatprep.subr.mxu0 0.0
    %1149 = vmatpush1.msra.mxu0 0.0
    %1150 = vmatprep.subr.mxu0 0.0
    %1151 = vmatpush1.msra.mxu0 0.0
    %1152 = vmatprep.subr.mxu0 0.0
    %1153 = vmatpush1.msra.mxu0 0.0
    %1154 = vmatprep.subr.mxu0 0.0
    %1155 = vmatpush1.msra.mxu0 0.0
    %1156 = vmatprep.subr.mxu0 0.0
    %1157 = vmatpush1.msra.mxu0 0.0
    %1158 = vmatprep.subr.mxu0 0.0
    %1159 = vmatpush1.msra.mxu0 0.0
    %1160 = vmatprep.subr.mxu0 0.0
    %1161 = vmatpush1.msra.mxu0 0.0
    %1162 = vmatprep.subr.mxu0 0.0
    %1163 = vmatpush1.msra.mxu0 0.0
    %1164 = vmatprep.subr.mxu0 0.0
    %1165 = vmatpush1.msra.mxu0 0.0
    %1166 = vmatprep.subr.mxu0 0.0
    %1167 = vmatpush1.msra.mxu0 0.0
    %1168 = vmatprep.subr.mxu0 0.0
    %1169 = vmatpush1.msra.mxu0 0.0
    %1170 = vmatprep.subr.mxu0 0.0
    %1171 = vmatpush1.msra.mxu0 0.0
    %1172 = vmatprep.subr.mxu0 0.0
    %1173 = vmatpush1.msra.mxu0 0.0
    %1174 = vmatprep.subr.mxu0 0.0
    %1175 = vmatpush1.msra.mxu0 0.0
    %1176 = vmatprep.subr.mxu0 0.0
    %1177 = vmatpush1.msra.mxu0 0.0
    %1178 = vmatprep.subr.mxu0 0.0
    %1179 = vmatpush1.msra.mxu0 0.0
    %1180 = vmatprep.mubr.f32.mxu0 0.0
    %1181 = vmatmul.mubr.f32.gmra.mrb[0].mxu0 %v1093
    %v1182 = vpop.f32.mrb[0].mxu0
    %v1183 = vadd.f32 0.0, %v1182
    %v1184 = vpop.f32.mrb[0].mxu0
    %1185 = vmatprep.mubr.f32.mxu0 0.0
    %1186 = vmatmul.mubr.f32.gmra.mrb[0].mxu0 %v1096
    %v1187 = vpop.f32.mrb[0].mxu0
    %v1188 = vadd.f32 0.0, %v1187
    %v1189 = vpop.f32.mrb[0].mxu0
    %1190 = vmatprep.mubr.f32.mxu0 0.0
    %1191 = vmatmul.mubr.f32.gmra.mrb[0].mxu0 %v1099
    %v1192 = vpop.f32.mrb[0].mxu0
    %v1193 = vadd.f32 0.0, %v1192
    %v1194 = vpop.f32.mrb[0].mxu0
    %1195 = vmatprep.mubr.f32.mxu0 0.0
    %1196 = vmatmul.mubr.f32.gmra.mrb[0].mxu0 %v1102
    %v1197 = vpop.f32.mrb[0].mxu0
    %v1198 = vadd.f32 0.0, %v1197
    %v1199 = vpop.f32.mrb[0].mxu0
    %1200 = vmatprep.mubr.f32.mxu0 0.0
    %1201 = vmatmul.mubr.f32.gmra.mrb[0].mxu0 %v1105
    %v1202 = vpop.f32.mrb[0].mxu0
    %v1203 = vadd.f32 0.0, %v1202
    %v1204 = vpop.f32.mrb[0].mxu0
    %1205 = vmatprep.mubr.f32.mxu0 0.0
    %1206 = vmatmul.mubr.f32.gmra.mrb[0].mxu0 %v1108
    %v1207 = vpop.f32.mrb[0].mxu0
    %v1208 = vadd.f32 0.0, %v1207
    %v1209 = vpop.f32.mrb[0].mxu0
    %1210 = vmatprep.mubr.f32.mxu0 0.0
    %1211 = vmatmul.mubr.f32.gmra.mrb[0].mxu0 %v1111
    %v1212 = vpop.f32.mrb[0].mxu0
    %v1213 = vadd.f32 0.0, %v1212
    %v1214 = vpop.f32.mrb[0].mxu0
    %1215 = vmatprep.mubr.f32.mxu0 0.0
    %1216 = vmatmul.mubr.f32.gmra.mrb[0].mxu0 %v1114
    %v1217 = vpop.f32.mrb[0].mxu0
    %v1218 = vadd.f32 0.0, %v1217
    %v1219 = vpop.f32.mrb[0].mxu0
    %1220 = vdwg.mxu0
    %v1221 = vmul.f32 %v832, %v941
    %v1222 = vmul.f32 %v837, %v946
    %v1223 = vsel %vm200, %v1221, 0.0
    %1224 = vadd.xlane.f32.xlu0 %v1223
    %v1225 = vpop.xlane.xlu0 %1224
    %v1226 = vsel %vm200, %v1222, 0.0
    %1227 = vadd.xlane.f32.xlu0 %v1226
    %v1228 = vpop.xlane.xlu0 %1227
    %v1229 = vsub.f32 %v1225, %v1225
    %v1230 = vsub.f32 %v1228, %v1228
    %v1231 = vmul.f32 %v1229, 1.442695
    %v1232 = vpow.pop %v1231
    %v1233 = vmul.f32 %v1230, 1.442695
    %v1234 = vpow.pop %v1233
    %v1235 = vmul.f32 %v1232, %v1050
    %v1236 = vmul.f32 %v1234, %v1055
    %v1237 = vrcp.pop %v1232
    %v1238 = vmul.f32 1.0, %v1237
    %v1239 = vrcp.pop %v1234
    %v1240 = vmul.f32 1.0, %v1239
    %v1241 = vmul.f32 %v1235, %v1238
    %v1242 = vmul.f32 %v1236, %v1240
    %v1243 = vmul.f32 %v842, %v941
    %v1244 = vmul.f32 %v847, %v946
    %v1245 = vsel %vm200, %v1243, 0.0
    %1246 = vadd.xlane.f32.xlu0 %v1245
    %v1247 = vpop.xlane.xlu0 %1246
    %v1248 = vsel %vm200, %v1244, 0.0
    %1249 = vadd.xlane.f32.xlu0 %v1248
    %v1250 = vpop.xlane.xlu0 %1249
    %v1251 = vmul.f32 %v842, %v951
    %v1252 = vmul.f32 %v847, %v956
    %v1253 = vsel %vm200, %v1251, 0.0
    %1254 = vadd.xlane.f32.xlu0 %v1253
    %v1255 = vpop.xlane.xlu0 %1254
    %v1256 = vsel %vm200, %v1252, 0.0
    %1257 = vadd.xlane.f32.xlu0 %v1256
    %v1258 = vpop.xlane.xlu0 %1257
    %v1259 = vmax.f32 %v1247, %v1255
    %v1260 = vmax.f32 %v1250, %v1258
    %v1261 = vsub.f32 %v1247, %v1259
    %v1262 = vsub.f32 %v1250, %v1260
    %v1263 = vmul.f32 %v1261, 1.442695
    %v1264 = vpow.pop %v1263
    %v1265 = vmul.f32 %v1262, 1.442695
    %v1266 = vpow.pop %v1265
    %v1267 = vsub.f32 %v1255, %v1259
    %v1268 = vsub.f32 %v1258, %v1260
    %v1269 = vmul.f32 %v1267, 1.442695
    %v1270 = vpow.pop %v1269
    %v1271 = vmul.f32 %v1268, 1.442695
    %v1272 = vpow.pop %v1271
    %v1273 = vadd.f32 %v1264, %v1270
    %v1274 = vadd.f32 %v1266, %v1272
    %v1275 = vmul.f32 %v1264, %v1050
    %v1276 = vmul.f32 %v1266, %v1055
    %v1277 = vmul.f32 %v1270, %v1060
    %v1278 = vmul.f32 %v1272, %v1065
    %v1279 = vadd.f32 %v1275, %v1277
    %v1280 = vadd.f32 %v1276, %v1278
    %v1281 = vrcp.pop %v1273
    %v1282 = vmul.f32 1.0, %v1281
    %v1283 = vrcp.pop %v1274
    %v1284 = vmul.f32 1.0, %v1283
    %v1285 = vmul.f32 %v1279, %v1282
    %v1286 = vmul.f32 %v1280, %v1284
    %v1287 = vmul.f32 %v852, %v941
    %v1288 = vmul.f32 %v857, %v946
    %v1289 = vsel %vm200, %v1287, 0.0
    %1290 = vadd.xlane.f32.xlu0 %v1289
    %v1291 = vpop.xlane.xlu0 %1290
    %v1292 = vsel %vm200, %v1288, 0.0
    %1293 = vadd.xlane.f32.xlu0 %v1292
    %v1294 = vpop.xlane.xlu0 %1293
    %v1295 = vmul.f32 %v852, %v951
    %v1296 = vmul.f32 %v857, %v956
    %v1297 = vsel %vm200, %v1295, 0.0
    %1298 = vadd.xlane.f32.xlu0 %v1297
    %v1299 = vpop.xlane.xlu0 %1298
    %v1300 = vsel %vm200, %v1296, 0.0
    %1301 = vadd.xlane.f32.xlu0 %v1300
    %v1302 = vpop.xlane.xlu0 %1301
    %v1303 = vmul.f32 %v852, %v961
    %v1304 = vmul.f32 %v857, %v966
    %v1305 = vsel %vm200, %v1303, 0.0
    %1306 = vadd.xlane.f32.xlu0 %v1305
    %v1307 = vpop.xlane.xlu0 %1306
    %v1308 = vsel %vm200, %v1304, 0.0
    %1309 = vadd.xlane.f32.xlu0 %v1308
    %v1310 = vpop.xlane.xlu0 %1309
    %v1311 = vmax.f32 %v1291, %v1299
    %v1312 = vmax.f32 %v1294, %v1302
    %v1313 = vmax.f32 %v1311, %v1307
    %v1314 = vmax.f32 %v1312, %v1310
    %v1315 = vsub.f32 %v1291, %v1313
    %v1316 = vsub.f32 %v1294, %v1314
    %v1317 = vmul.f32 %v1315, 1.442695
    %v1318 = vpow.pop %v1317
    %v1319 = vmul.f32 %v1316, 1.442695
    %v1320 = vpow.pop %v1319
    %v1321 = vsub.f32 %v1299, %v1313
    %v1322 = vsub.f32 %v1302, %v1314
    %v1323 = vmul.f32 %v1321, 1.442695
    %v1324 = vpow.pop %v1323
    %v1325 = vmul.f32 %v1322, 1.442695
    %v1326 = vpow.pop %v1325
    %v1327 = vsub.f32 %v1307, %v1313
    %v1328 = vsub.f32 %v1310, %v1314
    %v1329 = vmul.f32 %v1327, 1.442695
    %v1330 = vpow.pop %v1329
    %v1331 = vmul.f32 %v1328, 1.442695
    %v1332 = vpow.pop %v1331
    %v1333 = vadd.f32 %v1318, %v1324
    %v1334 = vadd.f32 %v1320, %v1326
    %v1335 = vadd.f32 %v1333, %v1330
    %v1336 = vadd.f32 %v1334, %v1332
    %v1337 = vmul.f32 %v1318, %v1050
    %v1338 = vmul.f32 %v1320, %v1055
    %v1339 = vmul.f32 %v1324, %v1060
    %v1340 = vmul.f32 %v1326, %v1065
    %v1341 = vadd.f32 %v1337, %v1339
    %v1342 = vadd.f32 %v1338, %v1340
    %v1343 = vmul.f32 %v1330, %v1070
    %v1344 = vmul.f32 %v1332, %v1075
    %v1345 = vadd.f32 %v1341, %v1343
    %v1346 = vadd.f32 %v1342, %v1344
    %v1347 = vrcp.pop %v1335
    %v1348 = vmul.f32 1.0, %v1347
    %v1349 = vrcp.pop %v1336
    %v1350 = vmul.f32 1.0, %v1349
    %v1351 = vmul.f32 %v1345, %v1348
    %v1352 = vmul.f32 %v1346, %v1350
    %v1353 = vmul.f32 %v862, %v941
    %v1354 = vmul.f32 %v867, %v946
    %v1355 = vsel %vm200, %v1353, 0.0
    %1356 = vadd.xlane.f32.xlu0 %v1355
    %v1357 = vpop.xlane.xlu0 %1356
    %v1358 = vsel %vm200, %v1354, 0.0
    %1359 = vadd.xlane.f32.xlu0 %v1358
    %v1360 = vpop.xlane.xlu0 %1359
    %v1361 = vmul.f32 %v862, %v951
    %v1362 = vmul.f32 %v867, %v956
    %v1363 = vsel %vm200, %v1361, 0.0
    %1364 = vadd.xlane.f32.xlu0 %v1363
    %v1365 = vpop.xlane.xlu0 %1364
    %v1366 = vsel %vm200, %v1362, 0.0
    %1367 = vadd.xlane.f32.xlu0 %v1366
    %v1368 = vpop.xlane.xlu0 %1367
    %v1369 = vmul.f32 %v862, %v961
    %v1370 = vmul.f32 %v867, %v966
    %v1371 = vsel %vm200, %v1369, 0.0
    %1372 = vadd.xlane.f32.xlu0 %v1371
    %v1373 = vpop.xlane.xlu0 %1372
    %v1374 = vsel %vm200, %v1370, 0.0
    %1375 = vadd.xlane.f32.xlu0 %v1374
    %v1376 = vpop.xlane.xlu0 %1375
    %v1377 = vmul.f32 %v862, %v971
    %v1378 = vmul.f32 %v867, %v976
    %v1379 = vsel %vm200, %v1377, 0.0
    %1380 = vadd.xlane.f32.xlu0 %v1379
    %v1381 = vpop.xlane.xlu0 %1380
    %v1382 = vsel %vm200, %v1378, 0.0
    %1383 = vadd.xlane.f32.xlu0 %v1382
    %v1384 = vpop.xlane.xlu0 %1383
    %v1385 = vmax.f32 %v1357, %v1365
    %v1386 = vmax.f32 %v1360, %v1368
    %v1387 = vmax.f32 %v1385, %v1373
    %v1388 = vmax.f32 %v1386, %v1376
    %v1389 = vmax.f32 %v1387, %v1381
    %v1390 = vmax.f32 %v1388, %v1384
    %v1391 = vsub.f32 %v1357, %v1389
    %v1392 = vsub.f32 %v1360, %v1390
    %v1393 = vmul.f32 %v1391, 1.442695
    %v1394 = vpow.pop %v1393
    %v1395 = vmul.f32 %v1392, 1.442695
    %v1396 = vpow.pop %v1395
    %v1397 = vsub.f32 %v1365, %v1389
    %v1398 = vsub.f32 %v1368, %v1390
    %v1399 = vmul.f32 %v1397, 1.442695
    %v1400 = vpow.pop %v1399
    %v1401 = vmul.f32 %v1398, 1.442695
    %v1402 = vpow.pop %v1401
    %v1403 = vsub.f32 %v1373, %v1389
    %v1404 = vsub.f32 %v1376, %v1390
    %v1405 = vmul.f32 %v1403, 1.442695
    %v1406 = vpow.pop %v1405
    %v1407 = vmul.f32 %v1404, 1.442695
    %v1408 = vpow.pop %v1407
    %v1409 = vsub.f32 %v1381, %v1389
    %v1410 = vsub.f32 %v1384, %v1390
    %v1411 = vmul.f32 %v1409, 1.442695
    %v1412 = vpow.pop %v1411
    %v1413 = vmul.f32 %v1410, 1.442695
    %v1414 = vpow.pop %v1413
    %v1415 = vadd.f32 %v1394, %v1400
    %v1416 = vadd.f32 %v1396, %v1402
    %v1417 = vadd.f32 %v1415, %v1406
    %v1418 = vadd.f32 %v1416, %v1408
    %v1419 = vadd.f32 %v1417, %v1412
    %v1420 = vadd.f32 %v1418, %v1414
    %v1421 = vmul.f32 %v1394, %v1050
    %v1422 = vmul.f32 %v1396, %v1055
    %v1423 = vmul.f32 %v1400, %v1060
    %v1424 = vmul.f32 %v1402, %v1065
    %v1425 = vadd.f32 %v1421, %v1423
    %v1426 = vadd.f32 %v1422, %v1424
    %v1427 = vmul.f32 %v1406, %v1070
    %v1428 = vmul.f32 %v1408, %v1075
    %v1429 = vadd.f32 %v1425, %v1427
    %v1430 = vadd.f32 %v1426, %v1428
    %v1431 = vmul.f32 %v1412, %v1080
    %v1432 = vmul.f32 %v1414, %v1085
    %v1433 = vadd.f32 %v1429, %v1431
    %v1434 = vadd.f32 %v1430, %v1432
    %v1435 = vrcp.pop %v1419
    %v1436 = vmul.f32 1.0, %v1435
    %v1437 = vrcp.pop %v1420
    %v1438 = vmul.f32 1.0, %v1437
    %v1439 = vmul.f32 %v1433, %v1436
    %v1440 = vmul.f32 %v1434, %v1438
    %v1441 = vld [vmem:[%s2] sm:$0xff]
    %v1442 = vld [vmem:[%s2 + $0x8] sm:$0xff]
    %vm1443 = vcmask 31744
    %v1444 = vsel %vm1443, %v1441, -inf
    %1445 = vmax.xlane.f32.xlu0 %v1444
    %v1446 = vpop.xlane.xlu0 %1445
    %v1447 = vsel %vm1443, %v1442, -inf
    %1448 = vmax.xlane.f32.xlu0 %v1447
    %v1449 = vpop.xlane.xlu0 %1448
    %v1450 = vsub.f32 %v1441, %v1446
    %v1451 = vsub.f32 %v1442, %v1449
    %v1452 = vmul.f32 %v1450, 1.442695
    %v1453 = vpow.pop %v1452
    %v1454 = vmul.f32 %v1451, 1.442695
    %v1455 = vpow.pop %v1454
    %v1456 = vsel %vm1443, %v1453, 0.0
    %1457 = vadd.xlane.f32.xlu0 %v1456
    %v1458 = vpop.xlane.xlu0 %1457
    %v1459 = vsel %vm1443, %v1455, 0.0
    %1460 = vadd.xlane.f32.xlu0 %v1459
    %v1461 = vpop.xlane.xlu0 %1460
    %v1462 = vrcp.pop %v1458
    %v1463 = vmul.f32 %v1453, %v1462
    %v1464 = vrcp.pop %v1461
    %v1465 = vmul.f32 %v1455, %v1464
    %1467 = vset.pattern.permute.xlu0 0
    %1468 = vperm.xlu0 %1467, %v1463
    %v1469 = vpop.permute.xlu0 %1468
    %1472 = vset.pattern.permute.xlu0 0
    %1473 = vperm.xlu0 %1472, %v1465
    %v1474 = vpop.permute.xlu0 %1473
    %v1476 = vmul.f32 %v1469, %v1183
    %v1477 = vmul.f32 %v1474, %v1188
    %1478 = vset.pattern.permute.xlu0 1
    %1479 = vperm.xlu0 %1478, %v1463
    %v1480 = vpop.permute.xlu0 %1479
    %1482 = vset.pattern.permute.xlu0 1
    %1483 = vperm.xlu0 %1482, %v1465
    %v1484 = vpop.permute.xlu0 %1483
    %v1486 = vmul.f32 %v1480, %v1193
    %v1487 = vmul.f32 %v1484, %v1198
    %v1488 = vadd.f32 %v1476, %v1486
    %v1489 = vadd.f32 %v1477, %v1487
    %1490 = vset.pattern.permute.xlu0 2
    %1491 = vperm.xlu0 %1490, %v1463
    %v1492 = vpop.permute.xlu0 %1491
    %1494 = vset.pattern.permute.xlu0 2
    %1495 = vperm.xlu0 %1494, %v1465
    %v1496 = vpop.permute.xlu0 %1495
    %v1498 = vmul.f32 %v1492, %v1203
    %v1499 = vmul.f32 %v1496, %v1208
    %v1500 = vadd.f32 %v1488, %v1498
    %v1501 = vadd.f32 %v1489, %v1499
    %1502 = vset.pattern.permute.xlu0 3
    %1503 = vperm.xlu0 %1502, %v1463
    %v1504 = vpop.permute.xlu0 %1503
    %1506 = vset.pattern.permute.xlu0 3
    %1507 = vperm.xlu0 %1506, %v1465
    %v1508 = vpop.permute.xlu0 %1507
    %v1510 = vmul.f32 %v1504, %v1213
    %v1511 = vmul.f32 %v1508, %v1218
    %v1512 = vadd.f32 %v1500, %v1510
    %v1513 = vadd.f32 %v1501, %v1511
    %s1514 = scalar_lea.vmem %s2, 16
    %v1515 = vld [vmem:[%s1514] sm:$0xff]
    %v1516 = vld [vmem:[%s1514 + $0x8] sm:$0xff]
    %v1517 = vsel %vm1443, %v1515, -inf
    %1518 = vmax.xlane.f32.xlu0 %v1517
    %v1519 = vpop.xlane.xlu0 %1518
    %v1520 = vsel %vm1443, %v1516, -inf
    %1521 = vmax.xlane.f32.xlu0 %v1520
    %v1522 = vpop.xlane.xlu0 %1521
    %v1523 = vsub.f32 %v1515, %v1519
    %v1524 = vsub.f32 %v1516, %v1522
    %v1525 = vmul.f32 %v1523, 1.442695
    %v1526 = vpow.pop %v1525
    %v1527 = vmul.f32 %v1524, 1.442695
    %v1528 = vpow.pop %v1527
    %v1529 = vsel %vm1443, %v1526, 0.0
    %1530 = vadd.xlane.f32.xlu0 %v1529
    %v1531 = vpop.xlane.xlu0 %1530
    %v1532 = vsel %vm1443, %v1528, 0.0
    %1533 = vadd.xlane.f32.xlu0 %v1532
    %v1534 = vpop.xlane.xlu0 %1533
    %v1535 = vrcp.pop %v1531
    %v1536 = vmul.f32 %v1526, %v1535
    %v1537 = vrcp.pop %v1534
    %v1538 = vmul.f32 %v1528, %v1537
    %1540 = vset.pattern.permute.xlu0 0
    %1541 = vperm.xlu0 %1540, %v1536
    %v1542 = vpop.permute.xlu0 %1541
    %1545 = vset.pattern.permute.xlu0 0
    %1546 = vperm.xlu0 %1545, %v1538
    %v1547 = vpop.permute.xlu0 %1546
    %v1549 = vmul.f32 %v1542, %v1183
    %v1550 = vmul.f32 %v1547, %v1188
    %1551 = vset.pattern.permute.xlu0 1
    %1552 = vperm.xlu0 %1551, %v1536
    %v1553 = vpop.permute.xlu0 %1552
    %1555 = vset.pattern.permute.xlu0 1
    %1556 = vperm.xlu0 %1555, %v1538
    %v1557 = vpop.permute.xlu0 %1556
    %v1559 = vmul.f32 %v1553, %v1193
    %v1560 = vmul.f32 %v1557, %v1198
    %v1561 = vadd.f32 %v1549, %v1559
    %v1562 = vadd.f32 %v1550, %v1560
    %1563 = vset.pattern.permute.xlu0 2
    %1564 = vperm.xlu0 %1563, %v1536
    %v1565 = vpop.permute.xlu0 %1564
    %1567 = vset.pattern.permute.xlu0 2
    %1568 = vperm.xlu0 %1567, %v1538
    %v1569 = vpop.permute.xlu0 %1568
    %v1571 = vmul.f32 %v1565, %v1203
    %v1572 = vmul.f32 %v1569, %v1208
    %v1573 = vadd.f32 %v1561, %v1571
    %v1574 = vadd.f32 %v1562, %v1572
    %1575 = vset.pattern.permute.xlu0 3
    %1576 = vperm.xlu0 %1575, %v1536
    %v1577 = vpop.permute.xlu0 %1576
    %1579 = vset.pattern.permute.xlu0 3
    %1580 = vperm.xlu0 %1579, %v1538
    %v1581 = vpop.permute.xlu0 %1580
    %v1583 = vmul.f32 %v1577, %v1213
    %v1584 = vmul.f32 %v1581, %v1218
    %v1585 = vadd.f32 %v1573, %v1583
    %v1586 = vadd.f32 %v1574, %v1584
    %s1587 = scalar_lea.vmem %s2, 32
    %v1588 = vld [vmem:[%s1587] sm:$0xff]
    %v1589 = vld [vmem:[%s1587 + $0x8] sm:$0xff]
    %v1590 = vsel %vm1443, %v1588, -inf
    %1591 = vmax.xlane.f32.xlu0 %v1590
    %v1592 = vpop.xlane.xlu0 %1591
    %v1593 = vsel %vm1443, %v1589, -inf
    %1594 = vmax.xlane.f32.xlu0 %v1593
    %v1595 = vpop.xlane.xlu0 %1594
    %v1596 = vsub.f32 %v1588, %v1592
    %v1597 = vsub.f32 %v1589, %v1595
    %v1598 = vmul.f32 %v1596, 1.442695
    %v1599 = vpow.pop %v1598
    %v1600 = vmul.f32 %v1597, 1.442695
    %v1601 = vpow.pop %v1600
    %v1602 = vsel %vm1443, %v1599, 0.0
    %1603 = vadd.xlane.f32.xlu0 %v1602
    %v1604 = vpop.xlane.xlu0 %1603
    %v1605 = vsel %vm1443, %v1601, 0.0
    %1606 = vadd.xlane.f32.xlu0 %v1605
    %v1607 = vpop.xlane.xlu0 %1606
    %v1608 = vrcp.pop %v1604
    %v1609 = vmul.f32 %v1599, %v1608
    %v1610 = vrcp.pop %v1607
    %v1611 = vmul.f32 %v1601, %v1610
    %1613 = vset.pattern.permute.xlu0 0
    %1614 = vperm.xlu0 %1613, %v1609
    %v1615 = vpop.permute.xlu0 %1614
    %1618 = vset.pattern.permute.xlu0 0
    %1619 = vperm.xlu0 %1618, %v1611
    %v1620 = vpop.permute.xlu0 %1619
    %v1622 = vmul.f32 %v1615, %v1183
    %v1623 = vmul.f32 %v1620, %v1188
    %1624 = vset.pattern.permute.xlu0 1
    %1625 = vperm.xlu0 %1624, %v1609
    %v1626 = vpop.permute.xlu0 %1625
    %1628 = vset.pattern.permute.xlu0 1
    %1629 = vperm.xlu0 %1628, %v1611
    %v1630 = vpop.permute.xlu0 %1629
    %v1632 = vmul.f32 %v1626, %v1193
    %v1633 = vmul.f32 %v1630, %v1198
    %v1634 = vadd.f32 %v1622, %v1632
    %v1635 = vadd.f32 %v1623, %v1633
    %1636 = vset.pattern.permute.xlu0 2
    %1637 = vperm.xlu0 %1636, %v1609
    %v1638 = vpop.permute.xlu0 %1637
    %1640 = vset.pattern.permute.xlu0 2
    %1641 = vperm.xlu0 %1640, %v1611
    %v1642 = vpop.permute.xlu0 %1641
    %v1644 = vmul.f32 %v1638, %v1203
    %v1645 = vmul.f32 %v1642, %v1208
    %v1646 = vadd.f32 %v1634, %v1644
    %v1647 = vadd.f32 %v1635, %v1645
    %1648 = vset.pattern.permute.xlu0 3
    %1649 = vperm.xlu0 %1648, %v1609
    %v1650 = vpop.permute.xlu0 %1649
    %1652 = vset.pattern.permute.xlu0 3
    %1653 = vperm.xlu0 %1652, %v1611
    %v1654 = vpop.permute.xlu0 %1653
    %v1656 = vmul.f32 %v1650, %v1213
    %v1657 = vmul.f32 %v1654, %v1218
    %v1658 = vadd.f32 %v1646, %v1656
    %v1659 = vadd.f32 %v1647, %v1657
    %s1660 = scalar_lea.vmem %s2, 48
    %v1661 = vld [vmem:[%s1660] sm:$0xff]
    %v1662 = vld [vmem:[%s1660 + $0x8] sm:$0xff]
    %v1663 = vsel %vm1443, %v1661, -inf
    %1664 = vmax.xlane.f32.xlu0 %v1663
    %v1665 = vpop.xlane.xlu0 %1664
    %v1666 = vsel %vm1443, %v1662, -inf
    %1667 = vmax.xlane.f32.xlu0 %v1666
    %v1668 = vpop.xlane.xlu0 %1667
    %v1669 = vsub.f32 %v1661, %v1665
    %v1670 = vsub.f32 %v1662, %v1668
    %v1671 = vmul.f32 %v1669, 1.442695
    %v1672 = vpow.pop %v1671
    %v1673 = vmul.f32 %v1670, 1.442695
    %v1674 = vpow.pop %v1673
    %v1675 = vsel %vm1443, %v1672, 0.0
    %1676 = vadd.xlane.f32.xlu0 %v1675
    %v1677 = vpop.xlane.xlu0 %1676
    %v1678 = vsel %vm1443, %v1674, 0.0
    %1679 = vadd.xlane.f32.xlu0 %v1678
    %v1680 = vpop.xlane.xlu0 %1679
    %v1681 = vrcp.pop %v1677
    %v1682 = vmul.f32 %v1672, %v1681
    %v1683 = vrcp.pop %v1680
    %v1684 = vmul.f32 %v1674, %v1683
    %1686 = vset.pattern.permute.xlu0 0
    %1687 = vperm.xlu0 %1686, %v1682
    %v1688 = vpop.permute.xlu0 %1687
    %1691 = vset.pattern.permute.xlu0 0
    %1692 = vperm.xlu0 %1691, %v1684
    %v1693 = vpop.permute.xlu0 %1692
    %v1695 = vmul.f32 %v1688, %v1183
    %v1696 = vmul.f32 %v1693, %v1188
    %1697 = vset.pattern.permute.xlu0 1
    %1698 = vperm.xlu0 %1697, %v1682
    %v1699 = vpop.permute.xlu0 %1698
    %1701 = vset.pattern.permute.xlu0 1
    %1702 = vperm.xlu0 %1701, %v1684
    %v1703 = vpop.permute.xlu0 %1702
    %v1705 = vmul.f32 %v1699, %v1193
    %v1706 = vmul.f32 %v1703, %v1198
    %v1707 = vadd.f32 %v1695, %v1705
    %v1708 = vadd.f32 %v1696, %v1706
    %1709 = vset.pattern.permute.xlu0 2
    %1710 = vperm.xlu0 %1709, %v1682
    %v1711 = vpop.permute.xlu0 %1710
    %1713 = vset.pattern.permute.xlu0 2
    %1714 = vperm.xlu0 %1713, %v1684
    %v1715 = vpop.permute.xlu0 %1714
    %v1717 = vmul.f32 %v1711, %v1203
    %v1718 = vmul.f32 %v1715, %v1208
    %v1719 = vadd.f32 %v1707, %v1717
    %v1720 = vadd.f32 %v1708, %v1718
    %1721 = vset.pattern.permute.xlu0 3
    %1722 = vperm.xlu0 %1721, %v1682
    %v1723 = vpop.permute.xlu0 %1722
    %1725 = vset.pattern.permute.xlu0 3
    %1726 = vperm.xlu0 %1725, %v1684
    %v1727 = vpop.permute.xlu0 %1726
    %v1729 = vmul.f32 %v1723, %v1213
    %v1730 = vmul.f32 %v1727, %v1218
    %v1731 = vadd.f32 %v1719, %v1729
    %v1732 = vadd.f32 %v1720, %v1730
    %v1733 = vld [vmem:[#allocation12] sm:$0xff]
    %v1734 = vld [vmem:[#allocation12 + $0x8] sm:$0xff]
    %v1735 = vld [vmem:[#allocation12 + $0x10] sm:$0xff]
    %v1736 = vld [vmem:[#allocation12 + $0x18] sm:$0xff]
    %v1737 = vld [vmem:[#allocation14] sm:$0x1]
    %v1739 = vlaneseq
    %v1740 = vshrl.u32 %v1739, 7
    %v1741 = vsub.s32 0, %v1740
    %v1742 = vrot.slane %v1737, %v1741
    %v1745 = vsel %vm200, %v1241, 0
    %v1748 = vsel %vm200, %v1242, 0
    %v1751 = vsel %vm200, %v1285, 0
    %v1754 = vsel %vm200, %v1286, 0
    %v1757 = vsel %vm200, %v1351, 0
    %v1760 = vsel %vm200, %v1352, 0
    %v1763 = vsel %vm200, %v1439, 0
    %v1766 = vsel %vm200, %v1440, 0
    %1768 = vmatprep.subr.mxu0 0.0
    %1769 = vmatpush1.msra.mxu0 %v1733
    %1770 = vmatprep.subr.mxu0 0.0
    %1771 = vmatpush1.msra.mxu0 %v1734
    %1772 = vmatprep.subr.mxu0 0.0
    %1773 = vmatpush1.msra.mxu0 %v1735
    %1774 = vmatprep.subr.mxu0 0.0
    %1775 = vmatpush1.msra.mxu0 %v1736
    %1776 = vmatprep.subr.mxu0 0.0
    %1777 = vmatpush1.msra.mxu0 0.0
    %1778 = vmatprep.subr.mxu0 0.0
    %1779 = vmatpush1.msra.mxu0 0.0
    %1780 = vmatprep.subr.mxu0 0.0
    %1781 = vmatpush1.msra.mxu0 0.0
    %1782 = vmatprep.subr.mxu0 0.0
    %1783 = vmatpush1.msra.mxu0 0.0
    %1784 = vmatprep.subr.mxu0 0.0
    %1785 = vmatpush1.msra.mxu0 0.0
    %1786 = vmatprep.subr.mxu0 0.0
    %1787 = vmatpush1.msra.mxu0 0.0
    %1788 = vmatprep.subr.mxu0 0.0
    %1789 = vmatpush1.msra.mxu0 0.0
    %1790 = vmatprep.subr.mxu0 0.0
    %1791 = vmatpush1.msra.mxu0 0.0
    %1792 = vmatprep.subr.mxu0 0.0
    %1793 = vmatpush1.msra.mxu0 0.0
    %1794 = vmatprep.subr.mxu0 0.0
    %1795 = vmatpush1.msra.mxu0 0.0
    %1796 = vmatprep.subr.mxu0 0.0
    %1797 = vmatpush1.msra.mxu0 0.0
    %1798 = vmatprep.subr.mxu0 0.0
    %1799 = vmatpush1.msra.mxu0 0.0
    %1800 = vmatprep.subr.mxu0 0.0
    %1801 = vmatpush1.msra.mxu0 0.0
    %1802 = vmatprep.subr.mxu0 0.0
    %1803 = vmatpush1.msra.mxu0 0.0
    %1804 = vmatprep.subr.mxu0 0.0
    %1805 = vmatpush1.msra.mxu0 0.0
    %1806 = vmatprep.subr.mxu0 0.0
    %1807 = vmatpush1.msra.mxu0 0.0
    %1808 = vmatprep.subr.mxu0 0.0
    %1809 = vmatpush1.msra.mxu0 0.0
    %1810 = vmatprep.subr.mxu0 0.0
    %1811 = vmatpush1.msra.mxu0 0.0
    %1812 = vmatprep.subr.mxu0 0.0
    %1813 = vmatpush1.msra.mxu0 0.0
    %1814 = vmatprep.subr.mxu0 0.0
    %1815 = vmatpush1.msra.mxu0 0.0
    %1816 = vmatprep.subr.mxu0 0.0
    %1817 = vmatpush1.msra.mxu0 0.0
    %1818 = vmatprep.subr.mxu0 0.0
    %1819 = vmatpush1.msra.mxu0 0.0
    %1820 = vmatprep.subr.mxu0 0.0
    %1821 = vmatpush1.msra.mxu0 0.0
    %1822 = vmatprep.subr.mxu0 0.0
    %1823 = vmatpush1.msra.mxu0 0.0
    %1824 = vmatprep.subr.mxu0 0.0
    %1825 = vmatpush1.msra.mxu0 0.0
    %1826 = vmatprep.subr.mxu0 0.0
    %1827 = vmatpush1.msra.mxu0 0.0
    %1828 = vmatprep.subr.mxu0 0.0
    %1829 = vmatpush1.msra.mxu0 0.0
    %1830 = vmatprep.subr.mxu0 0.0
    %1831 = vmatpush1.msra.mxu0 0.0
    %1832 = vmatprep.mubr.f32.mxu0 0.0
    %1833 = vmatmul.mubr.f32.gmra.mrb[0].mxu0 %v1745
    %v1834 = vpop.f32.mrb[0].mxu0
    %v1835 = vadd.f32 %v1742, %v1834
    %v1836 = vpop.f32.mrb[0].mxu0
    %1837 = vmatprep.mubr.f32.mxu0 0.0
    %1838 = vmatmul.mubr.f32.gmra.mrb[0].mxu0 %v1748
    %v1839 = vpop.f32.mrb[0].mxu0
    %v1840 = vadd.f32 %v1742, %v1839
    %v1841 = vpop.f32.mrb[0].mxu0
    %1842 = vmatprep.mubr.f32.mxu0 0.0
    %1843 = vmatmul.mubr.f32.gmra.mrb[0].mxu0 %v1751
    %v1844 = vpop.f32.mrb[0].mxu0
    %v1845 = vadd.f32 %v1742, %v1844
    %v1846 = vpop.f32.mrb[0].mxu0
    %1847 = vmatprep.mubr.f32.mxu0 0.0
    %1848 = vmatmul.mubr.f32.gmra.mrb[0].mxu0 %v1754
    %v1849 = vpop.f32.mrb[0].mxu0
    %v1850 = vadd.f32 %v1742, %v1849
    %v1851 = vpop.f32.mrb[0].mxu0
    %1852 = vmatprep.mubr.f32.mxu0 0.0
    %1853 = vmatmul.mubr.f32.gmra.mrb[0].mxu0 %v1757
    %v1854 = vpop.f32.mrb[0].mxu0
    %v1855 = vadd.f32 %v1742, %v1854
    %v1856 = vpop.f32.mrb[0].mxu0
    %1857 = vmatprep.mubr.f32.mxu0 0.0
    %1858 = vmatmul.mubr.f32.gmra.mrb[0].mxu0 %v1760
    %v1859 = vpop.f32.mrb[0].mxu0
    %v1860 = vadd.f32 %v1742, %v1859
    %v1861 = vpop.f32.mrb[0].mxu0
    %1862 = vmatprep.mubr.f32.mxu0 0.0
    %1863 = vmatmul.mubr.f32.gmra.mrb[0].mxu0 %v1763
    %v1864 = vpop.f32.mrb[0].mxu0
    %v1865 = vadd.f32 %v1742, %v1864
    %v1866 = vpop.f32.mrb[0].mxu0
    %1867 = vmatprep.mubr.f32.mxu0 0.0
    %1868 = vmatmul.mubr.f32.gmra.mrb[0].mxu0 %v1766
    %v1869 = vpop.f32.mrb[0].mxu0
    %v1870 = vadd.f32 %v1742, %v1869
    %v1871 = vpop.f32.mrb[0].mxu0
    %1872 = vdwg.mxu0
    %v1873 = vld [vmem:[%s13] sm:$0xff]
    %v1874 = vld [vmem:[%s13 + $0x8] sm:$0xff]
    %v1875 = vld [vmem:[%s13 + $0x10] sm:$0xff]
    %v1876 = vld [vmem:[%s13 + $0x18] sm:$0xff]
    %v1877 = vld [vmem:[%s14] sm:$0x1]
    %v1879 = vlaneseq
    %v1880 = vshrl.u32 %v1879, 7
    %v1881 = vsub.s32 0, %v1880
    %v1882 = vrot.slane %v1877, %v1881
    %v1885 = vsel %vm200, %v1512, 0
    %v1888 = vsel %vm200, %v1513, 0
    %v1891 = vsel %vm200, %v1585, 0
    %v1894 = vsel %vm200, %v1586, 0
    %v1897 = vsel %vm200, %v1658, 0
    %v1900 = vsel %vm200, %v1659, 0
    %v1903 = vsel %vm200, %v1731, 0
    %v1906 = vsel %vm200, %v1732, 0
    %1908 = vmatprep.subr.mxu0 0.0
    %1909 = vmatpush1.msra.mxu0 %v1873
    %1910 = vmatprep.subr.mxu0 0.0
    %1911 = vmatpush1.msra.mxu0 %v1874
    %1912 = vmatprep.subr.mxu0 0.0
    %1913 = vmatpush1.msra.mxu0 %v1875
    %1914 = vmatprep.subr.mxu0 0.0
    %1915 = vmatpush1.msra.mxu0 %v1876
    %1916 = vmatprep.subr.mxu0 0.0
    %1917 = vmatpush1.msra.mxu0 0.0
    %1918 = vmatprep.subr.mxu0 0.0
    %1919 = vmatpush1.msra.mxu0 0.0
    %1920 = vmatprep.subr.mxu0 0.0
    %1921 = vmatpush1.msra.mxu0 0.0
    %1922 = vmatprep.subr.mxu0 0.0
    %1923 = vmatpush1.msra.mxu0 0.0
    %1924 = vmatprep.subr.mxu0 0.0
    %1925 = vmatpush1.msra.mxu0 0.0
    %1926 = vmatprep.subr.mxu0 0.0
    %1927 = vmatpush1.msra.mxu0 0.0
    %1928 = vmatprep.subr.mxu0 0.0
    %1929 = vmatpush1.msra.mxu0 0.0
    %1930 = vmatprep.subr.mxu0 0.0
    %1931 = vmatpush1.msra.mxu0 0.0
    %1932 = vmatprep.subr.mxu0 0.0
    %1933 = vmatpush1.msra.mxu0 0.0
    %1934 = vmatprep.subr.mxu0 0.0
    %1935 = vmatpush1.msra.mxu0 0.0
    %1936 = vmatprep.subr.mxu0 0.0
    %1937 = vmatpush1.msra.mxu0 0.0
    %1938 = vmatprep.subr.mxu0 0.0
    %1939 = vmatpush1.msra.mxu0 0.0
    %1940 = vmatprep.subr.mxu0 0.0
    %1941 = vmatpush1.msra.mxu0 0.0
    %1942 = vmatprep.subr.mxu0 0.0
    %1943 = vmatpush1.msra.mxu0 0.0
    %1944 = vmatprep.subr.mxu0 0.0
    %1945 = vmatpush1.msra.mxu0 0.0
    %1946 = vmatprep.subr.mxu0 0.0
    %1947 = vmatpush1.msra.mxu0 0.0
    %1948 = vmatprep.subr.mxu0 0.0
    %1949 = vmatpush1.msra.mxu0 0.0
    %1950 = vmatprep.subr.mxu0 0.0
    %1951 = vmatpush1.msra.mxu0 0.0
    %1952 = vmatprep.subr.mxu0 0.0
    %1953 = vmatpush1.msra.mxu0 0.0
    %1954 = vmatprep.subr.mxu0 0.0
    %1955 = vmatpush1.msra.mxu0 0.0
    %1956 = vmatprep.subr.mxu0 0.0
    %1957 = vmatpush1.msra.mxu0 0.0
    %1958 = vmatprep.subr.mxu0 0.0
    %1959 = vmatpush1.msra.mxu0 0.0
    %1960 = vmatprep.subr.mxu0 0.0
    %1961 = vmatpush1.msra.mxu0 0.0
    %1962 = vmatprep.subr.mxu0 0.0
    %1963 = vmatpush1.msra.mxu0 0.0
    %1964 = vmatprep.subr.mxu0 0.0
    %1965 = vmatpush1.msra.mxu0 0.0
    %1966 = vmatprep.subr.mxu0 0.0
    %1967 = vmatpush1.msra.mxu0 0.0
    %1968 = vmatprep.subr.mxu0 0.0
    %1969 = vmatpush1.msra.mxu0 0.0
    %1970 = vmatprep.subr.mxu0 0.0
    %1971 = vmatpush1.msra.mxu0 0.0
    %1972 = vmatprep.mubr.f32.mxu0 0.0
    %1973 = vmatmul.mubr.f32.gmra.mrb[0].mxu0 %v1885
    %v1974 = vpop.f32.mrb[0].mxu0
    %v1975 = vadd.f32 %v1882, %v1974
    %v1976 = vpop.f32.mrb[0].mxu0
    %1977 = vmatprep.mubr.f32.mxu0 0.0
    %1978 = vmatmul.mubr.f32.gmra.mrb[0].mxu0 %v1888
    %v1979 = vpop.f32.mrb[0].mxu0
    %v1980 = vadd.f32 %v1882, %v1979
    %v1981 = vpop.f32.mrb[0].mxu0
    %1982 = vmatprep.mubr.f32.mxu0 0.0
    %1983 = vmatmul.mubr.f32.gmra.mrb[0].mxu0 %v1891
    %v1984 = vpop.f32.mrb[0].mxu0
    %v1985 = vadd.f32 %v1882, %v1984
    %v1986 = vpop.f32.mrb[0].mxu0
    %1987 = vmatprep.mubr.f32.mxu0 0.0
    %1988 = vmatmul.mubr.f32.gmra.mrb[0].mxu0 %v1894
    %v1989 = vpop.f32.mrb[0].mxu0
    %v1990 = vadd.f32 %v1882, %v1989
    %v1991 = vpop.f32.mrb[0].mxu0
    %1992 = vmatprep.mubr.f32.mxu0 0.0
    %1993 = vmatmul.mubr.f32.gmra.mrb[0].mxu0 %v1897
    %v1994 = vpop.f32.mrb[0].mxu0
    %v1995 = vadd.f32 %v1882, %v1994
    %v1996 = vpop.f32.mrb[0].mxu0
    %1997 = vmatprep.mubr.f32.mxu0 0.0
    %1998 = vmatmul.mubr.f32.gmra.mrb[0].mxu0 %v1900
    %v1999 = vpop.f32.mrb[0].mxu0
    %v2000 = vadd.f32 %v1882, %v1999
    %v2001 = vpop.f32.mrb[0].mxu0
    %2002 = vmatprep.mubr.f32.mxu0 0.0
    %2003 = vmatmul.mubr.f32.gmra.mrb[0].mxu0 %v1903
    %v2004 = vpop.f32.mrb[0].mxu0
    %v2005 = vadd.f32 %v1882, %v2004
    %v2006 = vpop.f32.mrb[0].mxu0
    %2007 = vmatprep.mubr.f32.mxu0 0.0
    %2008 = vmatmul.mubr.f32.gmra.mrb[0].mxu0 %v1906
    %v2009 = vpop.f32.mrb[0].mxu0
    %v2010 = vadd.f32 %v1882, %v2009
    %v2011 = vpop.f32.mrb[0].mxu0
    %2012 = vdwg.mxu0
    %v2013 = vmax.f32 %v1835, 0.0
    %v2014 = vmax.f32 %v1840, 0.0
    %v2015 = vmax.f32 %v1845, 0.0
    %v2016 = vmax.f32 %v1850, 0.0
    %v2017 = vmax.f32 %v1855, 0.0
    %v2018 = vmax.f32 %v1860, 0.0
    %v2019 = vmax.f32 %v1865, 0.0
    %v2020 = vmax.f32 %v1870, 0.0
    %v2021 = vadd.f32 %v2013, %v1241
    %v2022 = vadd.f32 %v2014, %v1242
    %v2023 = vadd.f32 %v2015, %v1285
    %v2024 = vadd.f32 %v2016, %v1286
    %v2025 = vadd.f32 %v2017, %v1351
    %v2026 = vadd.f32 %v2018, %v1352
    %v2027 = vadd.f32 %v2019, %v1439
    %v2028 = vadd.f32 %v2020, %v1440
    %v2029 = vstv %s183
    %v2030 = vmul.f32 %v2029, %v2021
    %v2031 = vmul.f32 %v2029, %v2022
    %v2032 = vmul.f32 %v2029, %v2023
    %v2033 = vmul.f32 %v2029, %v2024
    %v2034 = vmul.f32 %v2029, %v2025
    %v2035 = vmul.f32 %v2029, %v2026
    %v2036 = vmul.f32 %v2029, %v2027
    %v2037 = vmul.f32 %v2029, %v2028
    %v2038 = vadd.f32 %v2030, %v686
    %v2039 = vadd.f32 %v2031, %v687
    %v2040 = vadd.f32 %v2032, %v693
    %v2041 = vadd.f32 %v2033, %v694
    %v2042 = vadd.f32 %v2034, %v700
    %v2043 = vadd.f32 %v2035, %v701
    %v2044 = vadd.f32 %v2036, %v707
    %v2045 = vadd.f32 %v2037, %v708
    %v2046 = vmax.f32 %v1975, 0.0
    %v2047 = vmax.f32 %v1980, 0.0
    %v2048 = vmax.f32 %v1985, 0.0
    %v2049 = vmax.f32 %v1990, 0.0
    %v2050 = vmax.f32 %v1995, 0.0
    %v2051 = vmax.f32 %v2000, 0.0
    %v2052 = vmax.f32 %v2005, 0.0
    %v2053 = vmax.f32 %v2010, 0.0
    %v2054 = vadd.f32 %v2046, %v1512
    %v2055 = vadd.f32 %v2047, %v1513
    %v2056 = vadd.f32 %v2048, %v1585
    %v2057 = vadd.f32 %v2049, %v1586
    %v2058 = vadd.f32 %v2050, %v1658
    %v2059 = vadd.f32 %v2051, %v1659
    %v2060 = vadd.f32 %v2052, %v1731
    %v2061 = vadd.f32 %v2053, %v1732
    %v2062 = vstv %s184
    %v2063 = vmul.f32 %v2062, %v2054
    %v2064 = vmul.f32 %v2062, %v2055
    %v2065 = vmul.f32 %v2062, %v2056
    %v2066 = vmul.f32 %v2062, %v2057
    %v2067 = vmul.f32 %v2062, %v2058
    %v2068 = vmul.f32 %v2062, %v2059
    %v2069 = vmul.f32 %v2062, %v2060
    %v2070 = vmul.f32 %v2062, %v2061
    %v2071 = vadd.f32 %v2063, %v714
    %v2072 = vadd.f32 %v2064, %v715
    %v2073 = vadd.f32 %v2065, %v721
    %v2074 = vadd.f32 %v2066, %v722
    %v2075 = vadd.f32 %v2067, %v728
    %v2076 = vadd.f32 %v2068, %v729
    %v2077 = vadd.f32 %v2069, %v735
    %v2078 = vadd.f32 %v2070, %v736
    %2081 = vrot.lane.b32.xlu0 %v2071, 32
    %v2082 = vpop.permute.xlu0 %2081
    %2083 = vrot.lane.b32.xlu0 %v2072, 32
    %v2084 = vpop.permute.xlu0 %2083
    %2089 = vrot.lane.b32.xlu0 %v2040, 64
    %v2090 = vpop.permute.xlu0 %2089
    %2091 = vrot.lane.b32.xlu0 %v2041, 64
    %v2092 = vpop.permute.xlu0 %2091
    %2097 = vrot.lane.b32.xlu0 %v2073, 96
    %v2098 = vpop.permute.xlu0 %2097
    %2099 = vrot.lane.b32.xlu0 %v2074, 96
    %v2100 = vpop.permute.xlu0 %2099
    %2105 = vrot.lane.b32.xlu0 %v2075, 32
    %v2106 = vpop.permute.xlu0 %2105
    %2107 = vrot.lane.b32.xlu0 %v2076, 32
    %v2108 = vpop.permute.xlu0 %2107
    %2113 = vrot.lane.b32.xlu0 %v2044, 64
    %v2114 = vpop.permute.xlu0 %2113
    %2115 = vrot.lane.b32.xlu0 %v2045, 64
    %v2116 = vpop.permute.xlu0 %2115
    %2121 = vrot.lane.b32.xlu0 %v2077, 96
    %v2122 = vpop.permute.xlu0 %2121
    %2123 = vrot.lane.b32.xlu0 %v2078, 96
    %v2124 = vpop.permute.xlu0 %2123
    %v2127 = vsel %vm200, %v2038, %v2082
    %v2128 = vsel %vm200, %v2039, %v2084
    %vm2129 = vcmask 523264
    %v2130 = vsel %vm2129, %v2127, %v2090
    %v2131 = vsel %vm2129, %v2128, %v2092
    %vm2132 = vcmask 785408
    %v2133 = vsel %vm2132, %v2130, %v2098
    %v2134 = vsel %vm2132, %v2131, %v2100
    %v2135 = vsel %vm200, %v2042, %v2106
    %v2136 = vsel %vm200, %v2043, %v2108
    %v2137 = vsel %vm2129, %v2135, %v2114
    %v2138 = vsel %vm2129, %v2136, %v2116
    %v2139 = vsel %vm2132, %v2137, %v2122
    %v2140 = vsel %vm2132, %v2138, %v2124
    %2141 = vst [vmem:[#allocation19] sm:$0xff] %v2133
    %2142 = vst [vmem:[#allocation19 + $0x8] sm:$0xff] %v2139
    %2143 = vst [vmem:[#allocation19 + $0x10] sm:$0xff] %v2134
    %2144 = vst [vmem:[#allocation19 + $0x18] sm:$0xff] %v2140
    // Predicated region
    $region106: #{tpu_custom_call.1} parent=1 // pred_check
      _
    $region107: #{tpu_custom_call.1} parent=1 // pred_check_branch
      %2146 = sbr.rel (0) target = $region109
    $region108: #{tpu_custom_call.1} parent=1 // pred_region
      %s2148 = ssub.s32 512, 512
      %2149 = vsyncadd [#allocation4], %s2148
      %s2150 = sshll.u32 [#allocation19], 4
      %s2151 = int_to_ptr.vmem [resolvable:$true] %s2150
      %2156 = dma.vmem_to_hbm [thread:$0]  %s2151, 512, %s16, [#allocation4], 256, 256, 16
    $region109: #{tpu_custom_call.1} parent=1 // pred_fallthru
      _
    // Predicated region
    $region110: #{tpu_custom_call.1} parent=1 // pred_check
      _
    $region111: #{tpu_custom_call.1} parent=1 // pred_check_branch
      %2158 = sbr.rel (0) target = $region113
    $region112: #{tpu_custom_call.1} parent=1 // pred_region
      %2159 = dma.done [#allocation4], 512
    $region113: #{tpu_custom_call.1} parent=1 // pred_fallthru
      _
    %2160 = vsyncpa [#allocation3], 1
    %2161 = vsyncpa [#allocation7], 1
    %2162 = vsyncpa [#allocation10], 1
    %2163 = vsyncpa [#allocation13], 1
    %2164 = vsyncpa [#allocation16], 1
    %2165 = vsyncpa [#allocation4], 1
    %2166 = vsyncpa [#allocation5], 1

</llo_original>
